<compile_context>
chip_gen: v7x
topology: tpu7x:2x2x1
jax: 0.10.0
libtpu: 0.0.40
codegen_flags: <defaults>
</compile_context>

<pallas_src>
import functools

import jax
import jax.numpy as jnp
from jax.experimental import pallas as pl
from jax.experimental.pallas import tpu as pltpu

# ---------------- small config (consistent with Encoder.__init__) ----------
B = 2          # batch
N = 64         # input points
C_IN = 8       # in_channels
C_OUT = 32     # out_channels
S = 16         # sample_num
K = 8          # neighbor_num
BN_EPS = 1e-5

# Scoped-VMEM request: above v5e's 16 MiB default, safe on v6e (128 MiB) and
# v7x (64 MiB physical).  Tile sizing below targets a fraction of this so the
# double-buffered pipeline always fits.
VMEM_LIMIT_BYTES = 32 * 1024 * 1024
TILE_VMEM_BUDGET = 8 * 1024 * 1024


# ============================ fused Pallas kernel ===========================
def _encoder_mlp_kernel(x_ref, anc_ref, wg_ref, wa_ref, w_ref, b_ref, o_ref):
    """Fused transfer + PreExtraction + neighbor max-pool + PosExtraction.

    x_ref   : [ts, K, Dg]  bf16 normalized grouped features (one point tile)
    anc_ref : [ts, Ca]     bf16 per-point anchor features (sampled_feat)
    wg_ref  : [Dg, C]      bf16 transfer weight, grouped half
    wa_ref  : [Ca, C]      bf16 transfer weight, anchor half
    w_ref   : [4, C, C]    bf16 packed {pre_w1, pre_w2, pos_w1, pos_w2}
    b_ref   : [5, C]       f32  packed {bt, pre_b1, pre_b2, pos_b1, pos_b2}
    o_ref   : [ts, C]      f32  per-point output features (channels-last)
    """
    ts, k, dg = x_ref.shape
    c = o_ref.shape[-1]
    rows = ts * k

    # transfer Conv1d(Din->C,1)+BN+ReLU, anchor-split:
    #   W_t·[grouped | repeated_anchor] = grouped@Wg + broadcast_K(anchor@Wa)
    g = x_ref[...].reshape(rows, dg)                                      # bf16
    h = jnp.dot(g, wg_ref[...], preferred_element_type=jnp.float32)      # [rows, C]
    ha = jnp.dot(anc_ref[...], wa_ref[...],
                 preferred_element_type=jnp.float32) + b_ref[0:1, :]     # [ts, C]
    h = jnp.maximum(h.reshape(ts, k, c) + ha[:, None, :], 0.0).reshape(rows, c)

    # PreExtraction ConvBNReLURes1D (BN folded): net1 (Conv+BN+ReLU),
    # net2 (Conv+BN), residual, ReLU.  One bf16 cast per layer output.
    u = jnp.maximum(jnp.dot(h.astype(jnp.bfloat16), w_ref[0],
                            preferred_element_type=jnp.float32) + b_ref[1:2, :], 0.0)
    v = jnp.dot(u.astype(jnp.bfloat16), w_ref[1],
                preferred_element_type=jnp.float32) + b_ref[2:3, :]
    h = jnp.maximum(v + h, 0.0)                                           # [rows, C]

    # adaptive_max_pool1d over the K neighbors: sublane-group reduce (XLU slot,
    # effectively free next to the MXU/VALU work).
    hm = jnp.max(h.reshape(ts, k, c), axis=1)                             # [ts, C]

    # PosExtraction ConvBNReLURes1D
    u = jnp.maximum(jnp.dot(hm.astype(jnp.bfloat16), w_ref[2],
                            preferred_element_type=jnp.float32) + b_ref[3:4, :], 0.0)
    v = jnp.dot(u.astype(jnp.bfloat16), w_ref[3],
                preferred_element_type=jnp.float32) + b_ref[4:5, :]
    o_ref[...] = jnp.maximum(v + hm, 0.0)


def _pick_tile_s(s, k, dg, ca, c, budget=TILE_VMEM_BUDGET):
    """Largest point tile (full S, else a multiple of 8 dividing S) whose
    double-buffered inputs + f32 working set stay under `budget`.
    TODO(synk): key the budget off pltpu.get_tpu_info() per generation
    (v7x 64 MiB physical vs v5e/v6e 128 MiB)."""
    def cost(ts):
        rows = ts * k
        in_bytes = 2 * (rows * dg + ts * ca) * 2          # double-buffered bf16 tiles
        work_bytes = 3 * rows * c * 4                     # f32 intermediates
        out_bytes = 2 * ts * c * 4                        # double-buffered f32 output
        return in_bytes + work_bytes + out_bytes
    candidates = [s] + [ts for ts in range(s - (s % 8), 7, -8) if ts and s % ts == 0]
    for ts in candidates:
        if cost(ts) <= budget:
            return ts
    return candidates[-1]


def encoder_mlp(grouped, anchor, params):
    """grouped: [B,S,K,Dg] bf16, anchor: [B,S,Ca] bf16 -> [B,S,C_OUT] f32."""
    b, s, k, dg = grouped.shape
    ca = anchor.shape[-1]
    c = params["b_stack"].shape[-1]
    tile_s = _pick_tile_s(s, k, dg, ca, c)
    assert s % tile_s == 0 and (tile_s == s or tile_s % 8 == 0)
    grid = (b, s // tile_s)

    return pl.pallas_call(
        _encoder_mlp_kernel,
        out_shape=jax.ShapeDtypeStruct((b, s, c), jnp.float32),
        grid_spec=pltpu.PrefetchScalarGridSpec(
            num_scalar_prefetch=0,
            grid=grid,
            in_specs=[
                # point-tile inputs (double-buffered across the grid)
                pl.BlockSpec((None, tile_s, k, dg), lambda bi, si: (bi, si, 0, 0)),
                pl.BlockSpec((None, tile_s, ca), lambda bi, si: (bi, si, 0)),
                # packed weights / biases: constant index maps -> stay resident
                pl.BlockSpec((dg, c), lambda bi, si: (0, 0)),
                pl.BlockSpec((ca, c), lambda bi, si: (0, 0)),
                pl.BlockSpec((4, c, c), lambda bi, si: (0, 0, 0)),
                pl.BlockSpec((5, c), lambda bi, si: (0, 0)),
            ],
            out_specs=pl.BlockSpec((None, tile_s, c), lambda bi, si: (bi, si, 0)),
        ),
        compiler_params=pltpu.CompilerParams(
            # independent output tiles -> both axes shardable (v7x 2 TCs)
            dimension_semantics=("parallel", "parallel"),
            vmem_limit_bytes=VMEM_LIMIT_BYTES,
        ),
    )(grouped, anchor,
      params["wg"], params["wa"], params["w_stack"], params["b_stack"])


# ============================ JAX glue (geometry) ===========================
def index_points(points, idx):
    bq = points.shape[0]
    batch = jnp.arange(bq).reshape((bq,) + (1,) * (idx.ndim - 1))
    return points[batch, idx]


def square_distance(src, dst):
    dist = -2.0 * jnp.einsum("bnc,bmc->bnm", src, dst)
    dist += jnp.sum(src ** 2, -1)[:, :, None]
    dist += jnp.sum(dst ** 2, -1)[:, None, :]
    return dist


def knn_point(nsample, xyz, new_xyz):
    dists = square_distance(new_xyz, xyz)
    _, idx = jax.lax.top_k(-dists, nsample)
    return idx


def farthest_point_sample(xyz, nsample):
    # TODO(synk): pointnet2_utils.furthest_point_sample is an external CUDA op;
    # reproduced as a deterministic sequential FPS starting at index 0.
    bq, nq, _ = xyz.shape

    def body(i, state):
        idxs, dists, farthest = state
        idxs = idxs.at[:, i].set(farthest)
        centroid = jnp.take_along_axis(xyz, farthest[:, None, None], axis=1)
        d = jnp.sum((xyz - centroid) ** 2, axis=-1)
        dists = jnp.minimum(dists, d)
        farthest = jnp.argmax(dists, axis=-1).astype(jnp.int32)
        return idxs, dists, farthest

    init = (jnp.zeros((bq, nsample), jnp.int32),
            jnp.full((bq, nq), 1e10, jnp.float32),
            jnp.zeros((bq,), jnp.int32))
    idxs, _, _ = jax.lax.fori_loop(0, nsample, body, init)
    return idxs


def local_group(point_xyz, point_feat_ncl, params):
    """LocalGrouper (use_xyz=True, normalize='anchor').

    Returns the affine-normalized grouped features and the per-point anchor
    feature SEPARATELY (the K-times-repeated anchor is never materialized)."""
    bq = point_xyz.shape[0]
    feat = jnp.transpose(point_feat_ncl, (0, 2, 1))              # [B, N, C]
    fps_idx = farthest_point_sample(point_xyz, S)                # [B, S]
    sampled_xyz = index_points(point_xyz, fps_idx)               # [B, S, 3]
    sampled_feat = index_points(feat, fps_idx)                   # [B, S, C]
    idx = knn_point(K, point_xyz, sampled_xyz)                   # [B, S, K]
    grouped_xyz = index_points(point_xyz, idx)                   # [B, S, K, 3]
    grouped_feat = index_points(feat, idx)                       # [B, S, K, C]
    grouped_feat = jnp.concatenate([grouped_feat, grouped_xyz], axis=-1)
    mean = jnp.concatenate([sampled_feat, sampled_xyz], axis=-1)[:, :, None, :]
    diff = grouped_feat - mean
    std = jnp.std(diff.reshape(bq, -1), axis=-1, ddof=1).reshape(bq, 1, 1, 1)
    grouped = params["affine_alpha"] * (diff / (std + 1e-5)) + params["affine_beta"]
    return sampled_xyz, grouped, sampled_feat                    # f32


def encoder_forward(point_xyz, point_feat, params):
    sampled_xyz, grouped, anchor = local_group(point_xyz, point_feat, params)
    # bf16 producer -> halves the kernel's dominant HBM input stream (exact for
    # the matmuls, which run with bf16 MXU operands / f32 accumulation anyway).
    out_cl = encoder_mlp(grouped.astype(jnp.bfloat16),
                         anchor.astype(jnp.bfloat16), params)    # [B, S, C_OUT]
    # TODO(synk): at real S, fold this transpose into the out BlockSpec
    # ([B, C, S] block + in-kernel XLU transpose) or consume channels-last.
    feat_out = jnp.transpose(out_cl, (0, 2, 1))                  # [B, C_OUT, S]
    return sampled_xyz, feat_out


# ============================ parameters ====================================
def fold_conv_bn(key, cin, cout):
    kw, kb, kg, kbe, km, kv = jax.random.split(key, 6)
    w = 0.1 * jax.random.normal(kw, (cout, cin), jnp.float32)    # Conv1d [out,in,1]
    b = 0.1 * jax.random.normal(kb, (cout,), jnp.float32)
    gamma = 1.0 + 0.1 * jax.random.normal(kg, (cout,), jnp.float32)
    beta = 0.1 * jax.random.normal(kbe, (cout,), jnp.float32)
    mean = 0.1 * jax.random.normal(km, (cout,), jnp.float32)
    var = 0.5 + jax.random.uniform(kv, (cout,), jnp.float32)
    scale = gamma / jnp.sqrt(var + BN_EPS)
    w_eff = (w * scale[:, None]).T                               # [cin, cout]
    b_eff = (b - mean) * scale + beta                            # [cout]
    return w_eff, b_eff


def init_params(key):
    keys = jax.random.split(key, 7)
    din = 2 * C_IN + 3
    ca = C_IN + 3
    p = {}
    p["affine_alpha"] = 1.0 + 0.05 * jax.random.normal(keys[0], (1, 1, 1, ca), jnp.float32)
    p["affine_beta"] = 0.05 * jax.random.normal(keys[1], (1, 1, 1, ca), jnp.float32)
    wt, bt = fold_conv_bn(keys[2], din, C_OUT)
    w1, b1 = fold_conv_bn(keys[3], C_OUT, C_OUT)
    w2, b2 = fold_conv_bn(keys[4], C_OUT, C_OUT)
    w3, b3 = fold_conv_bn(keys[5], C_OUT, C_OUT)
    w4, b4 = fold_conv_bn(keys[6], C_OUT, C_OUT)
    # f32 originals, used only by the pure-JAX reference
    p["f32"] = dict(wt=wt, bt=bt, pre_w1=w1, pre_b1=b1, pre_w2=w2, pre_b2=b2,
                    pos_w1=w3, pos_b1=b3, pos_w2=w4, pos_b2=b4)
    # kernel-side parameters: anchor-split transfer weight, bf16 pre-cast,
    # packed into 4 arrays (instead of 11 f32 inputs).
    p["wg"] = wt[:ca].astype(jnp.bfloat16)                        # grouped half
    p["wa"] = wt[ca:].astype(jnp.bfloat16)                        # anchor half
    p["w_stack"] = jnp.stack([w1, w2, w3, w4]).astype(jnp.bfloat16)   # [4, C, C]
    p["b_stack"] = jnp.stack([bt, b1, b2, b3, b4])                # [5, C] f32
    return p


# ============================ reference (pure JAX, f32) =====================
def reference_pre_pos(grouped, anchor, params):
    bq, sq, kq, _ = grouped.shape
    f = params["f32"]
    rep = jnp.broadcast_to(anchor[:, :, None, :], (bq, sq, kq, anchor.shape[-1]))
    x = jnp.concatenate([grouped, rep], axis=-1).reshape(bq * sq * kq, -1)
    h = jax.nn.relu(x @ f["wt"] + f["bt"])
    u = jax.nn.relu(h @ f["pre_w1"] + f["pre_b1"])
    h = jax.nn.relu(u @ f["pre_w2"] + f["pre_b2"] + h)
    hm = h.reshape(bq * sq, kq, -1).max(axis=1)
    u = jax.nn.relu(hm @ f["pos_w1"] + f["pos_b1"])
    out = jax.nn.relu(u @ f["pos_w2"] + f["pos_b2"] + hm)
    return jnp.transpose(out.reshape(bq, sq, -1), (0, 2, 1))


# ============================ main ==========================================
if __name__ == "__main__":
    key = jax.random.PRNGKey(0)
    k_xyz, k_feat, k_par = jax.random.split(key, 3)
    point_xyz = jax.random.normal(k_xyz, (B, N, 3), jnp.float32)
    point_feat = jax.random.normal(k_feat, (B, C_IN, N), jnp.float32)
    params = init_params(k_par)

    fwd = jax.jit(functools.partial(encoder_forward, params=params))
    sampled_xyz, feat_out = fwd(point_xyz, point_feat)
    jax.block_until_ready((sampled_xyz, feat_out))

    assert sampled_xyz.shape == (B, S, 3)
    assert feat_out.shape == (B, C_OUT, S)
    assert bool(jnp.all(jnp.isfinite(feat_out)))

    # cross-check the fused kernel hot path against a pure-f32 JAX reference
    # (kernel uses bf16 MXU operands with f32 accumulation -> loose tolerance)
    _, grouped, anchor = local_group(point_xyz, point_feat, params)
    ref = reference_pre_pos(grouped, anchor, params)
    assert bool(jnp.allclose(feat_out, ref, atol=3e-2, rtol=3e-2))

    print("KERNEL_OK")
</pallas_src>

<mosaic_0001>
module attributes {stable_mosaic.version = 11 : i64} {
  func.func @_encoder_mlp_kernel(%arg0: i32, %arg1: i32, %arg2: memref<1x16x8x11xbf16, #tpu.memory_space<vmem>>, %arg3: memref<1x16x8xbf16, #tpu.memory_space<vmem>>, %arg4: memref<11x32xbf16, #tpu.memory_space<vmem>>, %arg5: memref<8x32xbf16, #tpu.memory_space<vmem>>, %arg6: memref<4x32x32xbf16, #tpu.memory_space<vmem>>, %arg7: memref<5x32xf32, #tpu.memory_space<vmem>>, %arg8: memref<1x16x32xf32, #tpu.memory_space<vmem>>) attributes {dimension_semantics = [#tpu.dimension_semantics<parallel>, #tpu.dimension_semantics<parallel>], iteration_bounds = array<i64: 2, 1>, scalar_prefetch = 0 : i64, scratch_operands = 0 : i64, tpu.core_type = #tpu.core_type<tc>, window_params = [{transform_indices = @transform_0, window_bounds = array<i64: 1, 16, 8, 11>}, {transform_indices = @transform_1, window_bounds = array<i64: 1, 16, 8>}, {pipeline_mode = #tpu.pipeline_mode<synchronous>, transform_indices = @transform_2, window_bounds = array<i64: 11, 32>}, {pipeline_mode = #tpu.pipeline_mode<synchronous>, transform_indices = @transform_3, window_bounds = array<i64: 8, 32>}, {pipeline_mode = #tpu.pipeline_mode<synchronous>, transform_indices = @transform_4, window_bounds = array<i64: 4, 32, 32>}, {pipeline_mode = #tpu.pipeline_mode<synchronous>, transform_indices = @transform_5, window_bounds = array<i64: 5, 32>}, {transform_indices = @transform_6, window_bounds = array<i64: 1, 16, 32>}]} {
    %c0 = arith.constant 0 : index
    %c0_0 = arith.constant 0 : index
    %c0_1 = arith.constant 0 : index
    %c0_2 = arith.constant 0 : index
    %0 = vector.load %arg2[%c0, %c0_0, %c0_1, %c0_2] : memref<1x16x8x11xbf16, #tpu.memory_space<vmem>>, vector<1x16x8x11xbf16>
    %1 = vector.shape_cast %0 : vector<1x16x8x11xbf16> to vector<16x8x11xbf16>
    %2 = vector.shape_cast %1 : vector<16x8x11xbf16> to vector<128x11xbf16>
    %c0_3 = arith.constant 0 : index
    %c0_4 = arith.constant 0 : index
    %3 = vector.load %arg4[%c0_3, %c0_4] : memref<11x32xbf16, #tpu.memory_space<vmem>>, vector<11x32xbf16>
    %cst = arith.constant dense<0.000000e+00> : vector<128x32xf32>
    %4 = tpu.matmul %2, %3, %cst {dimension_numbers = #tpu.dot_dimension_numbers<[1], [0], [0], [1], [0, 0, 1, 1], [], []>} : vector<128x11xbf16>, vector<11x32xbf16>, vector<128x32xf32> -> vector<128x32xf32>
    %c0_5 = arith.constant 0 : index
    %c0_6 = arith.constant 0 : index
    %c0_7 = arith.constant 0 : index
    %5 = vector.load %arg3[%c0_5, %c0_6, %c0_7] : memref<1x16x8xbf16, #tpu.memory_space<vmem>>, vector<1x16x8xbf16>
    %6 = vector.shape_cast %5 : vector<1x16x8xbf16> to vector<16x8xbf16>
    %c0_8 = arith.constant 0 : index
    %c0_9 = arith.constant 0 : index
    %7 = vector.load %arg5[%c0_8, %c0_9] : memref<8x32xbf16, #tpu.memory_space<vmem>>, vector<8x32xbf16>
    %cst_10 = arith.constant dense<0.000000e+00> : vector<16x32xf32>
    %8 = tpu.matmul %6, %7, %cst_10 {dimension_numbers = #tpu.dot_dimension_numbers<[1], [0], [0], [1], [0, 0, 1, 1], [], []>} : vector<16x8xbf16>, vector<8x32xbf16>, vector<16x32xf32> -> vector<16x32xf32>
    %c0_11 = arith.constant 0 : index
    %c0_12 = arith.constant 0 : index
    %9 = vector.load %arg7[%c0_11, %c0_12] : memref<5x32xf32, #tpu.memory_space<vmem>>, vector<1x32xf32>
    %10 = vector.broadcast %9 : vector<1x32xf32> to vector<16x32xf32>
    %11 = arith.addf %8, %10 : vector<16x32xf32>
    %12 = vector.shape_cast %4 : vector<128x32xf32> to vector<16x8x32xf32>
    %13 = vector.shape_cast %11 : vector<16x32xf32> to vector<16x1x32xf32>
    %14 = vector.broadcast %13 : vector<16x1x32xf32> to vector<16x8x32xf32>
    %15 = arith.addf %12, %14 : vector<16x8x32xf32>
    %cst_13 = arith.constant 0.000000e+00 : f32
    %16 = vector.broadcast %cst_13 : f32 to vector<16x8x32xf32>
    %17 = arith.maximumf %15, %16 : vector<16x8x32xf32>
    %18 = vector.shape_cast %17 : vector<16x8x32xf32> to vector<128x32xf32>
    %19 = arith.truncf %18 : vector<128x32xf32> to vector<128x32xbf16>
    %c0_14 = arith.constant 0 : index
    %c0_15 = arith.constant 0 : index
    %c0_16 = arith.constant 0 : index
    %20 = vector.load %arg6[%c0_14, %c0_15, %c0_16] : memref<4x32x32xbf16, #tpu.memory_space<vmem>>, vector<1x32x32xbf16>
    %21 = vector.shape_cast %20 : vector<1x32x32xbf16> to vector<32x32xbf16>
    %cst_17 = arith.constant dense<0.000000e+00> : vector<128x32xf32>
    %22 = tpu.matmul %19, %21, %cst_17 {dimension_numbers = #tpu.dot_dimension_numbers<[1], [0], [0], [1], [0, 0, 1, 1], [], []>} : vector<128x32xbf16>, vector<32x32xbf16>, vector<128x32xf32> -> vector<128x32xf32>
    %c1 = arith.constant 1 : index
    %c0_18 = arith.constant 0 : index
    %23 = vector.load %arg7[%c1, %c0_18] : memref<5x32xf32, #tpu.memory_space<vmem>>, vector<1x32xf32>
    %24 = vector.broadcast %23 : vector<1x32xf32> to vector<128x32xf32>
    %25 = arith.addf %22, %24 : vector<128x32xf32>
    %cst_19 = arith.constant 0.000000e+00 : f32
    %26 = vector.broadcast %cst_19 : f32 to vector<128x32xf32>
    %27 = arith.maximumf %25, %26 : vector<128x32xf32>
    %28 = arith.truncf %27 : vector<128x32xf32> to vector<128x32xbf16>
    %c1_20 = arith.constant 1 : index
    %c0_21 = arith.constant 0 : index
    %c0_22 = arith.constant 0 : index
    %29 = vector.load %arg6[%c1_20, %c0_21, %c0_22] : memref<4x32x32xbf16, #tpu.memory_space<vmem>>, vector<1x32x32xbf16>
    %30 = vector.shape_cast %29 : vector<1x32x32xbf16> to vector<32x32xbf16>
    %cst_23 = arith.constant dense<0.000000e+00> : vector<128x32xf32>
    %31 = tpu.matmul %28, %30, %cst_23 {dimension_numbers = #tpu.dot_dimension_numbers<[1], [0], [0], [1], [0, 0, 1, 1], [], []>} : vector<128x32xbf16>, vector<32x32xbf16>, vector<128x32xf32> -> vector<128x32xf32>
    %c2 = arith.constant 2 : index
    %c0_24 = arith.constant 0 : index
    %32 = vector.load %arg7[%c2, %c0_24] : memref<5x32xf32, #tpu.memory_space<vmem>>, vector<1x32xf32>
    %33 = vector.broadcast %32 : vector<1x32xf32> to vector<128x32xf32>
    %34 = arith.addf %31, %33 : vector<128x32xf32>
    %35 = arith.addf %34, %18 : vector<128x32xf32>
    %cst_25 = arith.constant 0.000000e+00 : f32
    %36 = vector.broadcast %cst_25 : f32 to vector<128x32xf32>
    %37 = arith.maximumf %35, %36 : vector<128x32xf32>
    %38 = vector.shape_cast %37 : vector<128x32xf32> to vector<16x8x32xf32>
    %cst_26 = arith.constant dense<0xFF800000> : vector<16x32xf32>
    %39 = vector.multi_reduction <maximumf>, %38, %cst_26 [1] : vector<16x8x32xf32> to vector<16x32xf32>
    %40 = arith.truncf %39 : vector<16x32xf32> to vector<16x32xbf16>
    %c2_27 = arith.constant 2 : index
    %c0_28 = arith.constant 0 : index
    %c0_29 = arith.constant 0 : index
    %41 = vector.load %arg6[%c2_27, %c0_28, %c0_29] : memref<4x32x32xbf16, #tpu.memory_space<vmem>>, vector<1x32x32xbf16>
    %42 = vector.shape_cast %41 : vector<1x32x32xbf16> to vector<32x32xbf16>
    %cst_30 = arith.constant dense<0.000000e+00> : vector<16x32xf32>
    %43 = tpu.matmul %40, %42, %cst_30 {dimension_numbers = #tpu.dot_dimension_numbers<[1], [0], [0], [1], [0, 0, 1, 1], [], []>} : vector<16x32xbf16>, vector<32x32xbf16>, vector<16x32xf32> -> vector<16x32xf32>
    %c3 = arith.constant 3 : index
    %c0_31 = arith.constant 0 : index
    %44 = vector.load %arg7[%c3, %c0_31] : memref<5x32xf32, #tpu.memory_space<vmem>>, vector<1x32xf32>
    %45 = vector.broadcast %44 : vector<1x32xf32> to vector<16x32xf32>
    %46 = arith.addf %43, %45 : vector<16x32xf32>
    %cst_32 = arith.constant 0.000000e+00 : f32
    %47 = vector.broadcast %cst_32 : f32 to vector<16x32xf32>
    %48 = arith.maximumf %46, %47 : vector<16x32xf32>
    %49 = arith.truncf %48 : vector<16x32xf32> to vector<16x32xbf16>
    %c3_33 = arith.constant 3 : index
    %c0_34 = arith.constant 0 : index
    %c0_35 = arith.constant 0 : index
    %50 = vector.load %arg6[%c3_33, %c0_34, %c0_35] : memref<4x32x32xbf16, #tpu.memory_space<vmem>>, vector<1x32x32xbf16>
    %51 = vector.shape_cast %50 : vector<1x32x32xbf16> to vector<32x32xbf16>
    %cst_36 = arith.constant dense<0.000000e+00> : vector<16x32xf32>
    %52 = tpu.matmul %49, %51, %cst_36 {dimension_numbers = #tpu.dot_dimension_numbers<[1], [0], [0], [1], [0, 0, 1, 1], [], []>} : vector<16x32xbf16>, vector<32x32xbf16>, vector<16x32xf32> -> vector<16x32xf32>
    %c4 = arith.constant 4 : index
    %c0_37 = arith.constant 0 : index
    %53 = vector.load %arg7[%c4, %c0_37] : memref<5x32xf32, #tpu.memory_space<vmem>>, vector<1x32xf32>
    %54 = vector.broadcast %53 : vector<1x32xf32> to vector<16x32xf32>
    %55 = arith.addf %52, %54 : vector<16x32xf32>
    %56 = arith.addf %55, %39 : vector<16x32xf32>
    %cst_38 = arith.constant 0.000000e+00 : f32
    %57 = vector.broadcast %cst_38 : f32 to vector<16x32xf32>
    %58 = arith.maximumf %56, %57 : vector<16x32xf32>
    %c0_39 = arith.constant 0 : index
    %c0_40 = arith.constant 0 : index
    %c0_41 = arith.constant 0 : index
    %59 = vector.load %arg8[%c0_39, %c0_40, %c0_41] : memref<1x16x32xf32, #tpu.memory_space<vmem>>, vector<1x16x32xf32>
    %60 = vector.shape_cast %59 : vector<1x16x32xf32> to vector<16x32xf32>
    %61 = vector.shape_cast %58 : vector<16x32xf32> to vector<1x16x32xf32>
    tpu.vector_store %arg8[%c0_39, %c0_40, %c0_41], %61 {strides = array<i32>} : memref<1x16x32xf32, #tpu.memory_space<vmem>>, vector<1x16x32xf32>,
    return
  }
  func.func @transform_0(%arg0: i32, %arg1: i32) -> (i32, i32, i32, i32) {
    %c0_i32 = arith.constant 0 : i32
    %c0_i32_0 = arith.constant 0 : i32
    %c0_i32_1 = arith.constant 0 : i32
    return %arg0, %arg1, %c0_i32, %c0_i32_0 : i32, i32, i32, i32
  }
  func.func @transform_1(%arg0: i32, %arg1: i32) -> (i32, i32, i32) {
    %c0_i32 = arith.constant 0 : i32
    %c0_i32_0 = arith.constant 0 : i32
    return %arg0, %arg1, %c0_i32 : i32, i32, i32
  }
  func.func @transform_2(%arg0: i32, %arg1: i32) -> (i32, i32) {
    %c0_i32 = arith.constant 0 : i32
    %c0_i32_0 = arith.constant 0 : i32
    %c0_i32_1 = arith.constant 0 : i32
    return %c0_i32, %c0_i32_0 : i32, i32
  }
  func.func @transform_3(%arg0: i32, %arg1: i32) -> (i32, i32) {
    %c0_i32 = arith.constant 0 : i32
    %c0_i32_0 = arith.constant 0 : i32
    %c0_i32_1 = arith.constant 0 : i32
    return %c0_i32, %c0_i32_0 : i32, i32
  }
  func.func @transform_4(%arg0: i32, %arg1: i32) -> (i32, i32, i32) {
    %c0_i32 = arith.constant 0 : i32
    %c0_i32_0 = arith.constant 0 : i32
    %c0_i32_1 = arith.constant 0 : i32
    %c0_i32_2 = arith.constant 0 : i32
    return %c0_i32, %c0_i32_0, %c0_i32_1 : i32, i32, i32
  }
  func.func @transform_5(%arg0: i32, %arg1: i32) -> (i32, i32) {
    %c0_i32 = arith.constant 0 : i32
    %c0_i32_0 = arith.constant 0 : i32
    %c0_i32_1 = arith.constant 0 : i32
    return %c0_i32, %c0_i32_0 : i32, i32
  }
  func.func @transform_6(%arg0: i32, %arg1: i32) -> (i32, i32, i32) {
    %c0_i32 = arith.constant 0 : i32
    %c0_i32_0 = arith.constant 0 : i32
    return %arg0, %arg1, %c0_i32 : i32, i32, i32
  }
}

</mosaic_0001>

<llo_original>
// kernel: custom-call.10
$region0: #{custom-call.10}
  %s0 = inlined_call_operand.vmem [shape: f32[2,64], index: 0, kind: output, shape index: {}]

// kernel: encoder_forward.1
$region0: #{encoder_forward.1}
  #allocation0 [shape = 'u32[]', space=smem, size = 0x4, offset = 0x4, fixed_abs, tag = 'smem constant byte address 0x4 - core index']
  #allocation1 [shape = 'u32[144,128]{1,0:T(1,128)}', space=vmem, size = 0x12000, scoped, tag = 'internal scratch']
  %s0 = inlined_call_operand.vmem [shape: bf16[2,16,8,11], index: 0, kind: input, shape index: {}]
  %s1 = inlined_call_operand.vmem [shape: bf16[2,16,8], index: 1, kind: input, shape index: {}]
  %s2 = inlined_call_operand.vmem [shape: bf16[11,32], index: 2, kind: input, shape index: {}]
  %s3 = inlined_call_operand.vmem [shape: bf16[8,32], index: 3, kind: input, shape index: {}]
  %s4 = inlined_call_operand.vmem [shape: bf16[4,32,32], index: 4, kind: input, shape index: {}]
  %s5 = inlined_call_operand.vmem [shape: f32[5,32], index: 5, kind: input, shape index: {}]
  %s6 = inlined_call_operand.hbm [shape: f32[2,16,32], index: 6, kind: output, shape index: {}]
  %s7 = sld [smem:[#allocation0]]
  $region57: #{encoder_forward.1} parent=0
    _
  %s9 = ssub.s32 1, %s7
  %s10 = scalar_select 0, %s9, %s7
  $region1: #{encoder_forward.1} parent=0
    #allocation2 [shape = 'u8[16384]{0}', space=vmem, size = 0x4000, scoped, tag = 'output window, operand 0']
    #allocation3 [shape = 's32[2]{0}', space=sflag, size = 0x8, scoped, tag = 'scoped memory for encoder_forward.1']
    %11 = vsyncpa [#allocation3], 0
    %s12 = scalar_lea.sflag [#allocation3], 1
    %13 = vsyncpa %s12, 0
    loop: start=0, step=1, limit=4
    $region2: #{encoder_forward.1} parent=1 // loop_pre_header
      _
    $region3: #{encoder_forward.1} parent=1 // loop_header
      %s15 = sphi 0, %s19
      %p16 = scmp.ge.s32.totalorder %s15, 4
      %s22 = sphi 0, %s34
      %s23 = sphi 0, %s30
      %s24 = sphi 0, %s22
      %s25 = sphi 0, %s23
      %s26 = sphi 0, %s24
      %s27 = sphi 0, %s25
      %s39 = sphi 0, %s41
      %s42 = sphi 0, %s39
      %s43 = sphi 0, %s42
      %s59 = sphi 0, %s43
      %s67 = sphi 0, %s69
      %s70 = sphi 0, %s67
      %s71 = sphi 0, %s70
      %s87 = sphi 0, %s71
      %s91 = sphi 0, %s91
      %s93 = sphi 0, %s91
      %s94 = sphi 0, %s93
      %s108 = sphi 0, %s94
      %s112 = sphi 0, %s112
      %s114 = sphi 0, %s112
      %s115 = sphi 0, %s114
      %s129 = sphi 0, %s115
      %s133 = sphi 0, %s133
      %s135 = sphi 0, %s133
      %s136 = sphi 0, %s135
      %s150 = sphi 0, %s136
      %s154 = sphi 0, %s154
      %s156 = sphi 0, %s154
      %s157 = sphi 0, %s156
      %s171 = sphi 0, %s157
      %s179 = sphi 0, %s181
      %s182 = sphi 0, %s179
      %s183 = sphi 0, %s182
      %s199 = sphi 0, %s183
    $region4: #{encoder_forward.1} parent=1 // loop_header_branch
      %18 = sbr.rel (%p16) target = $region8
    $region5: #{encoder_forward.1} parent=1 // loop_body
      %s20 = ssub.s32 %s15, 1
      %s21 = ssub.s32 %s15, 2
      %s28 = sadd.s32 1, %s23
      %p29 = scmp.ge.s32.totalorder %s28, 1
      %s30 = scalar_select %p29, 0, %s28
      %s31 = sadd.s32 1, %s22
      %s32 = scalar_select %p29, %s31, %s22
      %p33 = scmp.ge.s32.totalorder %s32, 2
      %s34 = scalar_select %p33, 0, %s32
      %s35 = ssub.s32 %s22, %s34
      %s36 = ssub.s32 %s23, %s30
      %s37 = sor.u32 %s35, %s36
      %p38 = scmp.eq.s32.totalorder %s37, 0
      %s40 = sadd.s32 %s39, 1
      %s41 = scalar_select %p38, %s39, %s40
      %p44 = pneg %p38
      %p45 = scmp.eq.s32.totalorder %s15, 1
      %p46 = por %p44, %p45
      %p47 = scmp.ne.s32.totalorder %s39, %s42
      %p48 = scmp.eq.s32.totalorder %s15, 0
      %p49 = por %p47, %p48
      %p50 = scmp.ne.s32.totalorder %s39, %s42
      %p51 = scmp.eq.s32.totalorder %s20, 1
      %p52 = por %p50, %p51
      %p53 = scmp.ne.s32.totalorder %s42, %s43
      %p54 = scmp.eq.s32.totalorder %s20, 0
      %p55 = por %p53, %p54
      %p56 = scmp.ne.s32.totalorder %s42, %s43
      %p57 = scmp.eq.s32.totalorder %s21, 1
      %p58 = por %p56, %p57
      %p60 = scmp.ne.s32.totalorder %s43, %s59
      %p61 = scmp.eq.s32.totalorder %s21, 0
      %p62 = por %p60, %p61
      %s63 = ssub.s32 %s22, %s34
      %s64 = ssub.s32 %s23, %s30
      %s65 = sor.u32 %s63, %s64
      %p66 = scmp.eq.s32.totalorder %s65, 0
      %s68 = sadd.s32 %s67, 1
      %s69 = scalar_select %p66, %s67, %s68
      %p72 = pneg %p66
      %p73 = scmp.eq.s32.totalorder %s15, 1
      %p74 = por %p72, %p73
      %p75 = scmp.ne.s32.totalorder %s67, %s70
      %p76 = scmp.eq.s32.totalorder %s15, 0
      %p77 = por %p75, %p76
      %p78 = scmp.ne.s32.totalorder %s67, %s70
      %p79 = scmp.eq.s32.totalorder %s20, 1
      %p80 = por %p78, %p79
      %p81 = scmp.ne.s32.totalorder %s70, %s71
      %p82 = scmp.eq.s32.totalorder %s20, 0
      %p83 = por %p81, %p82
      %p84 = scmp.ne.s32.totalorder %s70, %s71
      %p85 = scmp.eq.s32.totalorder %s21, 1
      %p86 = por %p84, %p85
      %p88 = scmp.ne.s32.totalorder %s71, %s87
      %p89 = scmp.eq.s32.totalorder %s21, 0
      %p90 = por %p88, %p89
      %s92 = sadd.s32 %s91, 1
      %p95 = scmp.eq.s32.totalorder %s15, 1
      %p96 = scmp.ne.s32.totalorder %s91, %s93
      %p97 = scmp.eq.s32.totalorder %s15, 0
      %p98 = por %p96, %p97
      %p99 = scmp.ne.s32.totalorder %s91, %s93
      %p100 = scmp.eq.s32.totalorder %s20, 1
      %p101 = por %p99, %p100
      %p102 = scmp.ne.s32.totalorder %s93, %s94
      %p103 = scmp.eq.s32.totalorder %s20, 0
      %p104 = por %p102, %p103
      %p105 = scmp.ne.s32.totalorder %s93, %s94
      %p106 = scmp.eq.s32.totalorder %s21, 1
      %p107 = por %p105, %p106
      %p109 = scmp.ne.s32.totalorder %s94, %s108
      %p110 = scmp.eq.s32.totalorder %s21, 0
      %p111 = por %p109, %p110
      %s113 = sadd.s32 %s112, 1
      %p116 = scmp.eq.s32.totalorder %s15, 1
      %p117 = scmp.ne.s32.totalorder %s112, %s114
      %p118 = scmp.eq.s32.totalorder %s15, 0
      %p119 = por %p117, %p118
      %p120 = scmp.ne.s32.totalorder %s112, %s114
      %p121 = scmp.eq.s32.totalorder %s20, 1
      %p122 = por %p120, %p121
      %p123 = scmp.ne.s32.totalorder %s114, %s115
      %p124 = scmp.eq.s32.totalorder %s20, 0
      %p125 = por %p123, %p124
      %p126 = scmp.ne.s32.totalorder %s114, %s115
      %p127 = scmp.eq.s32.totalorder %s21, 1
      %p128 = por %p126, %p127
      %p130 = scmp.ne.s32.totalorder %s115, %s129
      %p131 = scmp.eq.s32.totalorder %s21, 0
      %p132 = por %p130, %p131
      %s134 = sadd.s32 %s133, 1
      %p137 = scmp.eq.s32.totalorder %s15, 1
      %p138 = scmp.ne.s32.totalorder %s133, %s135
      %p139 = scmp.eq.s32.totalorder %s15, 0
      %p140 = por %p138, %p139
      %p141 = scmp.ne.s32.totalorder %s133, %s135
      %p142 = scmp.eq.s32.totalorder %s20, 1
      %p143 = por %p141, %p142
      %p144 = scmp.ne.s32.totalorder %s135, %s136
      %p145 = scmp.eq.s32.totalorder %s20, 0
      %p146 = por %p144, %p145
      %p147 = scmp.ne.s32.totalorder %s135, %s136
      %p148 = scmp.eq.s32.totalorder %s21, 1
      %p149 = por %p147, %p148
      %p151 = scmp.ne.s32.totalorder %s136, %s150
      %p152 = scmp.eq.s32.totalorder %s21, 0
      %p153 = por %p151, %p152
      %s155 = sadd.s32 %s154, 1
      %p158 = scmp.eq.s32.totalorder %s15, 1
      %p159 = scmp.ne.s32.totalorder %s154, %s156
      %p160 = scmp.eq.s32.totalorder %s15, 0
      %p161 = por %p159, %p160
      %p162 = scmp.ne.s32.totalorder %s154, %s156
      %p163 = scmp.eq.s32.totalorder %s20, 1
      %p164 = por %p162, %p163
      %p165 = scmp.ne.s32.totalorder %s156, %s157
      %p166 = scmp.eq.s32.totalorder %s20, 0
      %p167 = por %p165, %p166
      %p168 = scmp.ne.s32.totalorder %s156, %s157
      %p169 = scmp.eq.s32.totalorder %s21, 1
      %p170 = por %p168, %p169
      %p172 = scmp.ne.s32.totalorder %s157, %s171
      %p173 = scmp.eq.s32.totalorder %s21, 0
      %p174 = por %p172, %p173
      %s175 = ssub.s32 %s22, %s34
      %s176 = ssub.s32 %s23, %s30
      %s177 = sor.u32 %s175, %s176
      %p178 = scmp.eq.s32.totalorder %s177, 0
      %s180 = sadd.s32 %s179, 1
      %s181 = scalar_select %p178, %s179, %s180
      %p184 = pneg %p178
      %p185 = scmp.eq.s32.totalorder %s15, 1
      %p186 = por %p184, %p185
      %p187 = scmp.ne.s32.totalorder %s179, %s182
      %p188 = scmp.eq.s32.totalorder %s15, 0
      %p189 = por %p187, %p188
      %p190 = scmp.ne.s32.totalorder %s179, %s182
      %p191 = scmp.eq.s32.totalorder %s20, 1
      %p192 = por %p190, %p191
      %p193 = scmp.ne.s32.totalorder %s182, %s183
      %p194 = scmp.eq.s32.totalorder %s20, 0
      %p195 = por %p193, %p194
      %p196 = scmp.ne.s32.totalorder %s182, %s183
      %p197 = scmp.eq.s32.totalorder %s21, 1
      %p198 = por %p196, %p197
      %p200 = scmp.ne.s32.totalorder %s183, %s199
      %p201 = scmp.eq.s32.totalorder %s21, 0
      %p202 = por %p200, %p201
      %p203 = scmp.le.s32.totalorder 1, %s15
      %p204 = scmp.lt.s32.totalorder %s15, 3
      %p205 = pnand %p203, %p204
      %p206 = pneg %p205
      // Predicated region
      $region9: #{encoder_forward.1} parent=5 // pred_check
        _
      $region10: #{encoder_forward.1} parent=5 // pred_check_branch
        %208 = sbr.rel (%p205) target = $region12
      $region11: #{encoder_forward.1} parent=5 // pred_region
        %s209 = ssub.s32 %s15, 1
        // Predicated region
        $region13: #{encoder_forward.1} parent=11 // pred_check
          %p210 = pneg %p104
        $region14: #{encoder_forward.1} parent=11 // pred_check_branch
          %212 = sbr.rel (%p210) target = $region16
        $region15: #{encoder_forward.1} parent=11 // pred_region
          _
        $region16: #{encoder_forward.1} parent=11 // pred_fallthru
          _
        // Predicated region
        $region17: #{encoder_forward.1} parent=11 // pred_check
          %p213 = pneg %p125
        $region18: #{encoder_forward.1} parent=11 // pred_check_branch
          %215 = sbr.rel (%p213) target = $region20
        $region19: #{encoder_forward.1} parent=11 // pred_region
          _
        $region20: #{encoder_forward.1} parent=11 // pred_fallthru
          _
        // Predicated region
        $region21: #{encoder_forward.1} parent=11 // pred_check
          %p216 = pneg %p146
        $region22: #{encoder_forward.1} parent=11 // pred_check_branch
          %218 = sbr.rel (%p216) target = $region24
        $region23: #{encoder_forward.1} parent=11 // pred_region
          _
        $region24: #{encoder_forward.1} parent=11 // pred_fallthru
          _
        // Predicated region
        $region25: #{encoder_forward.1} parent=11 // pred_check
          %p219 = pneg %p167
        $region26: #{encoder_forward.1} parent=11 // pred_check_branch
          %221 = sbr.rel (%p219) target = $region28
        $region27: #{encoder_forward.1} parent=11 // pred_region
          _
        $region28: #{encoder_forward.1} parent=11 // pred_fallthru
          _
      $region12: #{encoder_forward.1} parent=5 // pred_fallthru
        _
      %p222 = scmp.lt.s32.totalorder %s15, 2
      // Predicated region
      $region29: #{encoder_forward.1} parent=5 // pred_check
        %p223 = pneg %p222
      $region30: #{encoder_forward.1} parent=5 // pred_check_branch
        %225 = sbr.rel (%p223) target = $region32
      $region31: #{encoder_forward.1} parent=5 // pred_region
        // Predicated region
        $region33: #{encoder_forward.1} parent=31 // pred_check
          %p226 = pneg %p49
        $region34: #{encoder_forward.1} parent=31 // pred_check_branch
          %228 = sbr.rel (%p226) target = $region36
        $region35: #{encoder_forward.1} parent=31 // pred_region
          %s229 = smul.u32 16, %s23
          %p230 = scmp.lt.s32.totalorder %s22, 1
          %s231 = scalar_select %p230, %s22, 1
          %p232 = scmp.lt.s32.totalorder %s229, 15
          %s233 = scalar_select %p232, %s229, 15
          %s234 = smul.addr %s231, 16
          %s235 = sadd.s32 %s233, %s234
          %s236 = smul.addr %s235, 4
          %s237 = scalar_lea.vmem %s0, %s236
          %s238 = smul.u32 16, %s23
        $region36: #{encoder_forward.1} parent=31 // pred_fallthru
          _
        // Predicated region
        $region37: #{encoder_forward.1} parent=31 // pred_check
          %p239 = pneg %p77
        $region38: #{encoder_forward.1} parent=31 // pred_check_branch
          %241 = sbr.rel (%p239) target = $region40
        $region39: #{encoder_forward.1} parent=31 // pred_region
          %s242 = smul.u32 2, %s23
          %p243 = scmp.lt.s32.totalorder %s22, 1
          %s244 = scalar_select %p243, %s22, 1
          %p245 = scmp.lt.s32.totalorder %s242, 1
          %s246 = scalar_select %p245, %s242, 1
          %s247 = smul.addr %s244, 2
          %s248 = sadd.s32 %s246, %s247
          %s249 = smul.addr %s248, 4
          %s250 = scalar_lea.vmem %s1, %s249
          %s251 = smul.u32 2, %s23
        $region40: #{encoder_forward.1} parent=31 // pred_fallthru
          _
      $region32: #{encoder_forward.1} parent=5 // pred_fallthru
        _
      %p252 = scmp.le.s32.totalorder 1, %s15
      %p253 = scmp.lt.s32.totalorder %s15, 3
      %p254 = pnand %p252, %p253
      %p255 = pneg %p254
      // Predicated region
      $region41: #{encoder_forward.1} parent=5 // pred_check
        _
      $region42: #{encoder_forward.1} parent=5 // pred_check_branch
        %257 = sbr.rel (%p254) target = $region44
      $region43: #{encoder_forward.1} parent=5 // pred_region
        %s258 = ssub.s32 %s15, 1
        %s259 = smul.u32 16, %s25
        %p260 = scmp.lt.s32.totalorder %s24, 1
        %s261 = scalar_select %p260, %s24, 1
        %p262 = scmp.lt.s32.totalorder %s259, 15
        %s263 = scalar_select %p262, %s259, 15
        %s264 = smul.addr %s261, 16
        %s265 = sadd.s32 %s263, %s264
        %s266 = smul.addr %s265, 4
        %s267 = scalar_lea.vmem %s0, %s266
        %p268 = pneg %p55
        %p269 = pneg %p52
        %s270 = smul.u32 2, %s25
        %p271 = scmp.lt.s32.totalorder %s24, 1
        %s272 = scalar_select %p271, %s24, 1
        %p273 = scmp.lt.s32.totalorder %s270, 1
        %s274 = scalar_select %p273, %s270, 1
        %s275 = smul.addr %s272, 2
        %s276 = sadd.s32 %s274, %s275
        %s277 = smul.addr %s276, 4
        %s278 = scalar_lea.vmem %s1, %s277
        %p279 = pneg %p83
        %p280 = pneg %p80
        %p281 = pneg %p104
        %p282 = pneg %p101
        %p283 = pneg %p125
        %p284 = pneg %p122
        %p285 = pneg %p146
        %p286 = pneg %p143
        %p287 = pneg %p167
        %p288 = pneg %p164
        %p289 = pneg %p195
        %p290 = pneg %p192
        %s291 = sand.u32 %s182, 1
        %s292 = scalar_lea.sflag [#allocation3], %s291
        %s293 = sand.u32 %s182, 1
        %s294 = smul.addr %s293, 16
        %s295 = scalar_lea.vmem [#allocation2], %s294
        %s296 = smul.u32 16, %s25
        %p297 = scmp.lt.s32.totalorder %s24, 1
        %s298 = scalar_select %p297, %s24, 1
        %p299 = scmp.lt.s32.totalorder %s296, 15
        %s300 = scalar_select %p299, %s296, 15
        %s301 = smul.addr %s298, 16
        %s302 = sadd.s32 %s300, %s301
        %s303 = smul.addr %s302, 4
        %s304 = scalar_lea.vmem %s0, %s303
        %s305 = smul.u32 16, %s25
        %s306 = smul.u32 2, %s25
        %p307 = scmp.lt.s32.totalorder %s24, 1
        %s308 = scalar_select %p307, %s24, 1
        %p309 = scmp.lt.s32.totalorder %s306, 1
        %s310 = scalar_select %p309, %s306, 1
        %s311 = smul.addr %s308, 2
        %s312 = sadd.s32 %s310, %s311
        %s313 = smul.addr %s312, 4
        %s314 = scalar_lea.vmem %s1, %s313
        %s315 = smul.u32 2, %s25
        %s316 = smul.u32 2, %s25
        %v318 = vld [vmem:[%s304] sm:$0xf]
        %v319 = vld [vmem:[%s304 + $0x4] sm:$0xf]
        %v320 = vld [vmem:[%s304 + $0x8] sm:$0xf]
        %v321 = vld [vmem:[%s304 + $0xc] sm:$0xf]
        %v322 = vld [vmem:[%s304 + $0x10] sm:$0xf]
        %v323 = vld [vmem:[%s304 + $0x14] sm:$0xf]
        %v324 = vld [vmem:[%s304 + $0x18] sm:$0xf]
        %v325 = vld [vmem:[%s304 + $0x1c] sm:$0xf]
        %v326 = vld [vmem:[%s304 + $0x20] sm:$0xf]
        %v327 = vld [vmem:[%s304 + $0x24] sm:$0xf]
        %v328 = vld [vmem:[%s304 + $0x28] sm:$0xf]
        %v329 = vld [vmem:[%s304 + $0x2c] sm:$0xf]
        %v330 = vld [vmem:[%s304 + $0x30] sm:$0xf]
        %v331 = vld [vmem:[%s304 + $0x34] sm:$0xf]
        %v332 = vld [vmem:[%s304 + $0x38] sm:$0xf]
        %v333 = vld [vmem:[%s304 + $0x3c] sm:$0xf]
        %v334 = vld [vmem:[%s2] sm:$0xf]
        %v335 = vld [vmem:[%s2 + $0x4] sm:$0x3]
        %v352 = vunpack.c.l.b16 %v318
        %v353 = vunpack.c.l.b16 %v319
        %v354 = vunpack.c.l.b16 %v320
        %v355 = vunpack.c.l.b16 %v321
        %v356 = vunpack.c.l.b16 %v322
        %v357 = vunpack.c.l.b16 %v323
        %v358 = vunpack.c.l.b16 %v324
        %v359 = vunpack.c.l.b16 %v325
        %v360 = vunpack.c.l.b16 %v326
        %v361 = vunpack.c.l.b16 %v327
        %v362 = vunpack.c.l.b16 %v328
        %v363 = vunpack.c.l.b16 %v329
        %v364 = vunpack.c.l.b16 %v330
        %v365 = vunpack.c.l.b16 %v331
        %v366 = vunpack.c.l.b16 %v332
        %v367 = vunpack.c.l.b16 %v333
        %v368 = vpack.c.b16 %v353, %v352
        %v369 = vpack.c.b16 %v355, %v354
        %v370 = vpack.c.b16 %v357, %v356
        %v371 = vpack.c.b16 %v359, %v358
        %v372 = vpack.c.b16 %v361, %v360
        %v373 = vpack.c.b16 %v363, %v362
        %v374 = vpack.c.b16 %v365, %v364
        %v375 = vpack.c.b16 %v367, %v366
        %v378 = vunpack.c.l.b16 %v334
        %v379 = vunpack.c.l.b16 %v335
        %v380 = vpack.c.b16 %v379, %v378
        %vm381 = vcmask 89088
        %v383 = vsel %vm381, %v368, 0
        %v386 = vsel %vm381, %v369, 0
        %v389 = vsel %vm381, %v370, 0
        %v392 = vsel %vm381, %v371, 0
        %v395 = vsel %vm381, %v372, 0
        %v398 = vsel %vm381, %v373, 0
        %v401 = vsel %vm381, %v374, 0
        %v404 = vsel %vm381, %v375, 0
        %vm406 = vcmask 1044480
        %vm407 = vcmask 1045504
        %v408 = vsel %vm406, 4294967295, 65535
        %v409 = vsel %vm407, %v408, 0
        %v411 = vand.u32 %v380, %v409
        %413 = vmatprep.subr.bf16.mxu0 0
        %414 = vmatpush1.bf16.msra.mxu0 %v411
        %415 = vmatprep.subr.bf16.mxu0 0
        %416 = vmatpush1.bf16.msra.mxu0 0
        %417 = vmatprep.subr.bf16.mxu0 0
        %418 = vmatpush1.bf16.msra.mxu0 0
        %419 = vmatprep.subr.bf16.mxu0 0
        %420 = vmatpush1.bf16.msra.mxu0 0
        %421 = vmatprep.subr.bf16.mxu0 0
        %422 = vmatpush1.bf16.msra.mxu0 0
        %423 = vmatprep.subr.bf16.mxu0 0
        %424 = vmatpush1.bf16.msra.mxu0 0
        %425 = vmatprep.subr.bf16.mxu0 0
        %426 = vmatpush1.bf16.msra.mxu0 0
        %427 = vmatprep.subr.bf16.mxu0 0
        %428 = vmatpush1.bf16.msra.mxu0 0
        %429 = vmatprep.subr.bf16.mxu0 0
        %430 = vmatpush1.bf16.msra.mxu0 0
        %431 = vmatprep.subr.bf16.mxu0 0
        %432 = vmatpush1.bf16.msra.mxu0 0
        %433 = vmatprep.subr.bf16.mxu0 0
        %434 = vmatpush1.bf16.msra.mxu0 0
        %435 = vmatprep.subr.bf16.mxu0 0
        %436 = vmatpush1.bf16.msra.mxu0 0
        %437 = vmatprep.subr.bf16.mxu0 0
        %438 = vmatpush1.bf16.msra.mxu0 0
        %439 = vmatprep.subr.bf16.mxu0 0
        %440 = vmatpush1.bf16.msra.mxu0 0
        %441 = vmatprep.subr.bf16.mxu0 0
        %442 = vmatpush1.bf16.msra.mxu0 0
        %443 = vmatprep.subr.bf16.mxu0 0
        %444 = vmatpush1.bf16.msra.mxu0 0
        %445 = vmatprep.mubr.bf16.mxu0 0
        %446 = vmatmul.mubr.bf16.gmra.mrb[0].mxu0 %v383
        %v447 = vpop.f32.mrb[0].mxu0
        %v448 = vadd.f32 0.0, %v447
        %v449 = vpop.f32.mrb[0].mxu0
        %v450 = vpop.f32.mrb[0].mxu0
        %v451 = vadd.f32 0.0, %v450
        %v452 = vpop.f32.mrb[0].mxu0
        %453 = vmatprep.mubr.bf16.mxu0 0
        %454 = vmatmul.mubr.bf16.gmra.mrb[0].mxu0 %v386
        %v455 = vpop.f32.mrb[0].mxu0
        %v456 = vadd.f32 0.0, %v455
        %v457 = vpop.f32.mrb[0].mxu0
        %v458 = vpop.f32.mrb[0].mxu0
        %v459 = vadd.f32 0.0, %v458
        %v460 = vpop.f32.mrb[0].mxu0
        %461 = vmatprep.mubr.bf16.mxu0 0
        %462 = vmatmul.mubr.bf16.gmra.mrb[0].mxu0 %v389
        %v463 = vpop.f32.mrb[0].mxu0
        %v464 = vadd.f32 0.0, %v463
        %v465 = vpop.f32.mrb[0].mxu0
        %v466 = vpop.f32.mrb[0].mxu0
        %v467 = vadd.f32 0.0, %v466
        %v468 = vpop.f32.mrb[0].mxu0
        %469 = vmatprep.mubr.bf16.mxu0 0
        %470 = vmatmul.mubr.bf16.gmra.mrb[0].mxu0 %v392
        %v471 = vpop.f32.mrb[0].mxu0
        %v472 = vadd.f32 0.0, %v471
        %v473 = vpop.f32.mrb[0].mxu0
        %v474 = vpop.f32.mrb[0].mxu0
        %v475 = vadd.f32 0.0, %v474
        %v476 = vpop.f32.mrb[0].mxu0
        %477 = vmatprep.mubr.bf16.mxu0 0
        %478 = vmatmul.mubr.bf16.gmra.mrb[0].mxu0 %v395
        %v479 = vpop.f32.mrb[0].mxu0
        %v480 = vadd.f32 0.0, %v479
        %v481 = vpop.f32.mrb[0].mxu0
        %v482 = vpop.f32.mrb[0].mxu0
        %v483 = vadd.f32 0.0, %v482
        %v484 = vpop.f32.mrb[0].mxu0
        %485 = vmatprep.mubr.bf16.mxu0 0
        %486 = vmatmul.mubr.bf16.gmra.mrb[0].mxu0 %v398
        %v487 = vpop.f32.mrb[0].mxu0
        %v488 = vadd.f32 0.0, %v487
        %v489 = vpop.f32.mrb[0].mxu0
        %v490 = vpop.f32.mrb[0].mxu0
        %v491 = vadd.f32 0.0, %v490
        %v492 = vpop.f32.mrb[0].mxu0
        %493 = vmatprep.mubr.bf16.mxu0 0
        %494 = vmatmul.mubr.bf16.gmra.mrb[0].mxu0 %v401
        %v495 = vpop.f32.mrb[0].mxu0
        %v496 = vadd.f32 0.0, %v495
        %v497 = vpop.f32.mrb[0].mxu0
        %v498 = vpop.f32.mrb[0].mxu0
        %v499 = vadd.f32 0.0, %v498
        %v500 = vpop.f32.mrb[0].mxu0
        %501 = vmatprep.mubr.bf16.mxu0 0
        %502 = vmatmul.mubr.bf16.gmra.mrb[0].mxu0 %v404
        %v503 = vpop.f32.mrb[0].mxu0
        %v504 = vadd.f32 0.0, %v503
        %v505 = vpop.f32.mrb[0].mxu0
        %v506 = vpop.f32.mrb[0].mxu0
        %v507 = vadd.f32 0.0, %v506
        %v508 = vpop.f32.mrb[0].mxu0
        %509 = vdwg.mxu0
        %v510 = vld [vmem:[%s314] sm:$0xf]
        %v511 = vld [vmem:[%s314 + $0x4] sm:$0xf]
        %v512 = vld [vmem:[%s3] sm:$0xf]
        %v513 = vld [vmem:[%s5] sm:$0x1]
        %v514 = vlaneseq
        %v515 = vshrl.u32 %v514, 7
        %v516 = vsub.s32 0, %v515
        %v517 = vrot.slane %v513, %v516
        %v520 = vunpack.c.l.b16 %v510
        %v521 = vunpack.c.l.b16 %v511
        %v522 = vpack.c.b16 %v521, %v520
        %vm523 = vcmask 64512
        %v525 = vsel %vm523, %v522, 0
        %vm527 = vcmask 1043456
        %v529 = vsel %vm527, %v512, 0
        %531 = vmatprep.subr.bf16.mxu0 0
        %532 = vmatpush1.bf16.msra.mxu0 %v529
        %533 = vmatprep.subr.bf16.mxu0 0
        %534 = vmatpush1.bf16.msra.mxu0 0
        %535 = vmatprep.subr.bf16.mxu0 0
        %536 = vmatpush1.bf16.msra.mxu0 0
        %537 = vmatprep.subr.bf16.mxu0 0
        %538 = vmatpush1.bf16.msra.mxu0 0
        %539 = vmatprep.subr.bf16.mxu0 0
        %540 = vmatpush1.bf16.msra.mxu0 0
        %541 = vmatprep.subr.bf16.mxu0 0
        %542 = vmatpush1.bf16.msra.mxu0 0
        %543 = vmatprep.subr.bf16.mxu0 0
        %544 = vmatpush1.bf16.msra.mxu0 0
        %545 = vmatprep.subr.bf16.mxu0 0
        %546 = vmatpush1.bf16.msra.mxu0 0
        %547 = vmatprep.subr.bf16.mxu0 0
        %548 = vmatpush1.bf16.msra.mxu0 0
        %549 = vmatprep.subr.bf16.mxu0 0
        %550 = vmatpush1.bf16.msra.mxu0 0
        %551 = vmatprep.subr.bf16.mxu0 0
        %552 = vmatpush1.bf16.msra.mxu0 0
        %553 = vmatprep.subr.bf16.mxu0 0
        %554 = vmatpush1.bf16.msra.mxu0 0
        %555 = vmatprep.subr.bf16.mxu0 0
        %556 = vmatpush1.bf16.msra.mxu0 0
        %557 = vmatprep.subr.bf16.mxu0 0
        %558 = vmatpush1.bf16.msra.mxu0 0
        %559 = vmatprep.subr.bf16.mxu0 0
        %560 = vmatpush1.bf16.msra.mxu0 0
        %561 = vmatprep.subr.bf16.mxu0 0
        %562 = vmatpush1.bf16.msra.mxu0 0
        %563 = vmatprep.mubr.bf16.mxu0 0
        %564 = vmatmul.mubr.bf16.gmra.mrb[0].mxu0 %v525
        %v565 = vpop.f32.mrb[0].mxu0
        %v566 = vadd.f32 %v517, %v565
        %v567 = vpop.f32.mrb[0].mxu0
        %v568 = vpop.f32.mrb[0].mxu0
        %v569 = vadd.f32 %v517, %v568
        %v570 = vpop.f32.mrb[0].mxu0
        %571 = vdwg.mxu0
        %v574 = vcombine.high %v566, %v566
        %v576 = vunpack.c.l.s4 1966171168
        %v577 = vunpack.c.0.s8 %v576
        %v578 = vlaneseq
        %v579 = vshrl.u32 %v578, 7
        %v580 = vsub.s32 %v577, %v579
        %v581 = vrot.slane %v566, %v580
        %v583 = vunpack.c.l.s4 1966171168
        %v584 = vunpack.c.0.s8 %v583
        %v585 = vlaneseq
        %v586 = vshrl.u32 %v585, 7
        %v587 = vsub.s32 %v584, %v586
        %v588 = vrot.slane %v574, %v587
        %v589 = vcombine.high %v581, %v581
        %v590 = vcombine.high %v588, %v588
        %v592 = vunpack.c.l.s4 1966171168
        %v593 = vunpack.c.0.s8 %v592
        %v594 = vlaneseq
        %v595 = vshrl.u32 %v594, 7
        %v596 = vsub.s32 %v593, %v595
        %v597 = vrot.slane %v581, %v596
        %v599 = vunpack.c.l.s4 1966171168
        %v600 = vunpack.c.0.s8 %v599
        %v601 = vlaneseq
        %v602 = vshrl.u32 %v601, 7
        %v603 = vsub.s32 %v600, %v602
        %v604 = vrot.slane %v588, %v603
        %v606 = vunpack.c.l.s4 1966171168
        %v607 = vunpack.c.0.s8 %v606
        %v608 = vlaneseq
        %v609 = vshrl.u32 %v608, 7
        %v610 = vsub.s32 %v607, %v609
        %v611 = vrot.slane %v589, %v610
        %v613 = vunpack.c.l.s4 1966171168
        %v614 = vunpack.c.0.s8 %v613
        %v615 = vlaneseq
        %v616 = vshrl.u32 %v615, 7
        %v617 = vsub.s32 %v614, %v616
        %v618 = vrot.slane %v590, %v617
        %v619 = vcombine.high %v597, %v597
        %v620 = vcombine.high %v604, %v604
        %v621 = vcombine.high %v611, %v611
        %v622 = vcombine.high %v618, %v618
        %v623 = vcombine.high %v569, %v569
        %v625 = vunpack.c.l.s4 1966171168
        %v626 = vunpack.c.0.s8 %v625
        %v627 = vlaneseq
        %v628 = vshrl.u32 %v627, 7
        %v629 = vsub.s32 %v626, %v628
        %v630 = vrot.slane %v569, %v629
        %v632 = vunpack.c.l.s4 1966171168
        %v633 = vunpack.c.0.s8 %v632
        %v634 = vlaneseq
        %v635 = vshrl.u32 %v634, 7
        %v636 = vsub.s32 %v633, %v635
        %v637 = vrot.slane %v623, %v636
        %v638 = vcombine.high %v630, %v630
        %v639 = vcombine.high %v637, %v637
        %v641 = vunpack.c.l.s4 1966171168
        %v642 = vunpack.c.0.s8 %v641
        %v643 = vlaneseq
        %v644 = vshrl.u32 %v643, 7
        %v645 = vsub.s32 %v642, %v644
        %v646 = vrot.slane %v630, %v645
        %v648 = vunpack.c.l.s4 1966171168
        %v649 = vunpack.c.0.s8 %v648
        %v650 = vlaneseq
        %v651 = vshrl.u32 %v650, 7
        %v652 = vsub.s32 %v649, %v651
        %v653 = vrot.slane %v637, %v652
        %v655 = vunpack.c.l.s4 1966171168
        %v656 = vunpack.c.0.s8 %v655
        %v657 = vlaneseq
        %v658 = vshrl.u32 %v657, 7
        %v659 = vsub.s32 %v656, %v658
        %v660 = vrot.slane %v638, %v659
        %v662 = vunpack.c.l.s4 1966171168
        %v663 = vunpack.c.0.s8 %v662
        %v664 = vlaneseq
        %v665 = vshrl.u32 %v664, 7
        %v666 = vsub.s32 %v663, %v665
        %v667 = vrot.slane %v639, %v666
        %v668 = vcombine.high %v646, %v646
        %v669 = vcombine.high %v653, %v653
        %v670 = vcombine.high %v660, %v660
        %v671 = vcombine.high %v667, %v667
        %v672 = vlaneseq
        %v673 = vshrl.u32 %v672, 7
        %v674 = vsub.s32 0, %v673
        %v675 = vrot.slane %v597, %v674
        %v676 = vlaneseq
        %v677 = vshrl.u32 %v676, 7
        %v678 = vsub.s32 0, %v677
        %v679 = vrot.slane %v611, %v678
        %v680 = vlaneseq
        %v681 = vshrl.u32 %v680, 7
        %v682 = vsub.s32 0, %v681
        %v683 = vrot.slane %v619, %v682
        %v684 = vlaneseq
        %v685 = vshrl.u32 %v684, 7
        %v686 = vsub.s32 0, %v685
        %v687 = vrot.slane %v621, %v686
        %v688 = vlaneseq
        %v689 = vshrl.u32 %v688, 7
        %v690 = vsub.s32 0, %v689
        %v691 = vrot.slane %v604, %v690
        %v692 = vlaneseq
        %v693 = vshrl.u32 %v692, 7
        %v694 = vsub.s32 0, %v693
        %v695 = vrot.slane %v618, %v694
        %v696 = vlaneseq
        %v697 = vshrl.u32 %v696, 7
        %v698 = vsub.s32 0, %v697
        %v699 = vrot.slane %v620, %v698
        %v700 = vlaneseq
        %v701 = vshrl.u32 %v700, 7
        %v702 = vsub.s32 0, %v701
        %v703 = vrot.slane %v622, %v702
        %v704 = vlaneseq
        %v705 = vshrl.u32 %v704, 7
        %v706 = vsub.s32 0, %v705
        %v707 = vrot.slane %v646, %v706
        %v708 = vlaneseq
        %v709 = vshrl.u32 %v708, 7
        %v710 = vsub.s32 0, %v709
        %v711 = vrot.slane %v660, %v710
        %v712 = vlaneseq
        %v713 = vshrl.u32 %v712, 7
        %v714 = vsub.s32 0, %v713
        %v715 = vrot.slane %v668, %v714
        %v716 = vlaneseq
        %v717 = vshrl.u32 %v716, 7
        %v718 = vsub.s32 0, %v717
        %v719 = vrot.slane %v670, %v718
        %v720 = vlaneseq
        %v721 = vshrl.u32 %v720, 7
        %v722 = vsub.s32 0, %v721
        %v723 = vrot.slane %v653, %v722
        %v724 = vlaneseq
        %v725 = vshrl.u32 %v724, 7
        %v726 = vsub.s32 0, %v725
        %v727 = vrot.slane %v667, %v726
        %v728 = vlaneseq
        %v729 = vshrl.u32 %v728, 7
        %v730 = vsub.s32 0, %v729
        %v731 = vrot.slane %v669, %v730
        %v732 = vlaneseq
        %v733 = vshrl.u32 %v732, 7
        %v734 = vsub.s32 0, %v733
        %v735 = vrot.slane %v671, %v734
        %v752 = vadd.f32 %v448, %v675
        %v753 = vadd.f32 %v451, %v679
        %v754 = vadd.f32 %v456, %v683
        %v755 = vadd.f32 %v459, %v687
        %v756 = vadd.f32 %v464, %v691
        %v757 = vadd.f32 %v467, %v695
        %v758 = vadd.f32 %v472, %v699
        %v759 = vadd.f32 %v475, %v703
        %v760 = vadd.f32 %v480, %v707
        %v761 = vadd.f32 %v483, %v711
        %v762 = vadd.f32 %v488, %v715
        %v763 = vadd.f32 %v491, %v719
        %v764 = vadd.f32 %v496, %v723
        %v765 = vadd.f32 %v499, %v727
        %v766 = vadd.f32 %v504, %v731
        %v767 = vadd.f32 %v507, %v735
        %v768 = vmax.f32 %v752, 0.0
        %v769 = vmax.f32 %v753, 0.0
        %v770 = vmax.f32 %v754, 0.0
        %v771 = vmax.f32 %v755, 0.0
        %v772 = vmax.f32 %v756, 0.0
        %v773 = vmax.f32 %v757, 0.0
        %v774 = vmax.f32 %v758, 0.0
        %v775 = vmax.f32 %v759, 0.0
        %v776 = vmax.f32 %v760, 0.0
        %v777 = vmax.f32 %v761, 0.0
        %v778 = vmax.f32 %v762, 0.0
        %v779 = vmax.f32 %v763, 0.0
        %v780 = vmax.f32 %v764, 0.0
        %v781 = vmax.f32 %v765, 0.0
        %v782 = vmax.f32 %v766, 0.0
        %v783 = vmax.f32 %v767, 0.0
        %v784 = vpack.c.bf16 %v769, %v768
        %v785 = vpack.c.bf16 %v771, %v770
        %v786 = vpack.c.bf16 %v773, %v772
        %v787 = vpack.c.bf16 %v775, %v774
        %v788 = vpack.c.bf16 %v777, %v776
        %v789 = vpack.c.bf16 %v779, %v778
        %v790 = vpack.c.bf16 %v781, %v780
        %v791 = vpack.c.bf16 %v783, %v782
        %v792 = vld [vmem:[%s4] sm:$0xf]
        %v793 = vld [vmem:[%s4 + $0x4] sm:$0xf]
        %v794 = vld [vmem:[%s4 + $0x8] sm:$0xf]
        %v795 = vld [vmem:[%s4 + $0xc] sm:$0xf]
        %v796 = vld [vmem:[%s5 + $0x1] sm:$0x1]
        %v797 = vlaneseq
        %v798 = vshrl.u32 %v797, 7
        %v799 = vsub.s32 0, %v798
        %v800 = vrot.slane %v796, %v799
        %v805 = vunpack.c.l.b16 %v792
        %v806 = vunpack.c.l.b16 %v793
        %v807 = vunpack.c.l.b16 %v794
        %v808 = vunpack.c.l.b16 %v795
        %v809 = vpack.c.b16 %v806, %v805
        %v810 = vpack.c.b16 %v808, %v807
        %vm813 = vcmask 261120
        %v815 = vsel %vm813, %v784, 0
        %v818 = vsel %vm813, %v785, 0
        %v821 = vsel %vm813, %v786, 0
        %v824 = vsel %vm813, %v787, 0
        %v827 = vsel %vm813, %v788, 0
        %v830 = vsel %vm813, %v789, 0
        %v833 = vsel %vm813, %v790, 0
        %v836 = vsel %vm813, %v791, 0
        %838 = vmatprep.subr.bf16.mxu0 0
        %839 = vmatpush1.bf16.msra.mxu0 %v809
        %840 = vmatprep.subr.bf16.mxu0 0
        %841 = vmatpush1.bf16.msra.mxu0 %v810
        %842 = vmatprep.subr.bf16.mxu0 0
        %843 = vmatpush1.bf16.msra.mxu0 0
        %844 = vmatprep.subr.bf16.mxu0 0
        %845 = vmatpush1.bf16.msra.mxu0 0
        %846 = vmatprep.subr.bf16.mxu0 0
        %847 = vmatpush1.bf16.msra.mxu0 0
        %848 = vmatprep.subr.bf16.mxu0 0
        %849 = vmatpush1.bf16.msra.mxu0 0
        %850 = vmatprep.subr.bf16.mxu0 0
        %851 = vmatpush1.bf16.msra.mxu0 0
        %852 = vmatprep.subr.bf16.mxu0 0
        %853 = vmatpush1.bf16.msra.mxu0 0
        %854 = vmatprep.subr.bf16.mxu0 0
        %855 = vmatpush1.bf16.msra.mxu0 0
        %856 = vmatprep.subr.bf16.mxu0 0
        %857 = vmatpush1.bf16.msra.mxu0 0
        %858 = vmatprep.subr.bf16.mxu0 0
        %859 = vmatpush1.bf16.msra.mxu0 0
        %860 = vmatprep.subr.bf16.mxu0 0
        %861 = vmatpush1.bf16.msra.mxu0 0
        %862 = vmatprep.subr.bf16.mxu0 0
        %863 = vmatpush1.bf16.msra.mxu0 0
        %864 = vmatprep.subr.bf16.mxu0 0
        %865 = vmatpush1.bf16.msra.mxu0 0
        %866 = vmatprep.subr.bf16.mxu0 0
        %867 = vmatpush1.bf16.msra.mxu0 0
        %868 = vmatprep.subr.bf16.mxu0 0
        %869 = vmatpush1.bf16.msra.mxu0 0
        %870 = vmatprep.mubr.bf16.mxu0 0
        %871 = vmatmul.mubr.bf16.gmra.mrb[0].mxu0 %v815
        %v872 = vpop.f32.mrb[0].mxu0
        %v873 = vadd.f32 %v800, %v872
        %v874 = vpop.f32.mrb[0].mxu0
        %v875 = vpop.f32.mrb[0].mxu0
        %v876 = vadd.f32 %v800, %v875
        %v877 = vpop.f32.mrb[0].mxu0
        %878 = vmatprep.mubr.bf16.mxu0 0
        %879 = vmatmul.mubr.bf16.gmra.mrb[0].mxu0 %v818
        %v880 = vpop.f32.mrb[0].mxu0
        %v881 = vadd.f32 %v800, %v880
        %v882 = vpop.f32.mrb[0].mxu0
        %v883 = vpop.f32.mrb[0].mxu0
        %v884 = vadd.f32 %v800, %v883
        %v885 = vpop.f32.mrb[0].mxu0
        %886 = vmatprep.mubr.bf16.mxu0 0
        %887 = vmatmul.mubr.bf16.gmra.mrb[0].mxu0 %v821
        %v888 = vpop.f32.mrb[0].mxu0
        %v889 = vadd.f32 %v800, %v888
        %v890 = vpop.f32.mrb[0].mxu0
        %v891 = vpop.f32.mrb[0].mxu0
        %v892 = vadd.f32 %v800, %v891
        %v893 = vpop.f32.mrb[0].mxu0
        %894 = vmatprep.mubr.bf16.mxu0 0
        %895 = vmatmul.mubr.bf16.gmra.mrb[0].mxu0 %v824
        %v896 = vpop.f32.mrb[0].mxu0
        %v897 = vadd.f32 %v800, %v896
        %v898 = vpop.f32.mrb[0].mxu0
        %v899 = vpop.f32.mrb[0].mxu0
        %v900 = vadd.f32 %v800, %v899
        %v901 = vpop.f32.mrb[0].mxu0
        %902 = vmatprep.mubr.bf16.mxu0 0
        %903 = vmatmul.mubr.bf16.gmra.mrb[0].mxu0 %v827
        %v904 = vpop.f32.mrb[0].mxu0
        %v905 = vadd.f32 %v800, %v904
        %v906 = vpop.f32.mrb[0].mxu0
        %v907 = vpop.f32.mrb[0].mxu0
        %v908 = vadd.f32 %v800, %v907
        %v909 = vpop.f32.mrb[0].mxu0
        %910 = vmatprep.mubr.bf16.mxu0 0
        %911 = vmatmul.mubr.bf16.gmra.mrb[0].mxu0 %v830
        %v912 = vpop.f32.mrb[0].mxu0
        %v913 = vadd.f32 %v800, %v912
        %v914 = vpop.f32.mrb[0].mxu0
        %v915 = vpop.f32.mrb[0].mxu0
        %v916 = vadd.f32 %v800, %v915
        %v917 = vpop.f32.mrb[0].mxu0
        %918 = vmatprep.mubr.bf16.mxu0 0
        %919 = vmatmul.mubr.bf16.gmra.mrb[0].mxu0 %v833
        %v920 = vpop.f32.mrb[0].mxu0
        %v921 = vadd.f32 %v800, %v920
        %v922 = vpop.f32.mrb[0].mxu0
        %v923 = vpop.f32.mrb[0].mxu0
        %v924 = vadd.f32 %v800, %v923
        %v925 = vpop.f32.mrb[0].mxu0
        %926 = vmatprep.mubr.bf16.mxu0 0
        %927 = vmatmul.mubr.bf16.gmra.mrb[0].mxu0 %v836
        %v928 = vpop.f32.mrb[0].mxu0
        %v929 = vadd.f32 %v800, %v928
        %v930 = vpop.f32.mrb[0].mxu0
        %v931 = vpop.f32.mrb[0].mxu0
        %v932 = vadd.f32 %v800, %v931
        %v933 = vpop.f32.mrb[0].mxu0
        %934 = vdwg.mxu0
        %v935 = vmax.f32 %v873, 0.0
        %v936 = vmax.f32 %v876, 0.0
        %v937 = vmax.f32 %v881, 0.0
        %v938 = vmax.f32 %v884, 0.0
        %v939 = vmax.f32 %v889, 0.0
        %v940 = vmax.f32 %v892, 0.0
        %v941 = vmax.f32 %v897, 0.0
        %v942 = vmax.f32 %v900, 0.0
        %v943 = vmax.f32 %v905, 0.0
        %v944 = vmax.f32 %v908, 0.0
        %v945 = vmax.f32 %v913, 0.0
        %v946 = vmax.f32 %v916, 0.0
        %v947 = vmax.f32 %v921, 0.0
        %v948 = vmax.f32 %v924, 0.0
        %v949 = vmax.f32 %v929, 0.0
        %v950 = vmax.f32 %v932, 0.0
        %v951 = vpack.c.bf16 %v936, %v935
        %v952 = vpack.c.bf16 %v938, %v937
        %v953 = vpack.c.bf16 %v940, %v939
        %v954 = vpack.c.bf16 %v942, %v941
        %v955 = vpack.c.bf16 %v944, %v943
        %v956 = vpack.c.bf16 %v946, %v945
        %v957 = vpack.c.bf16 %v948, %v947
        %v958 = vpack.c.bf16 %v950, %v949
        %s959 = scalar_lea.vmem %s4, 16
        %v960 = vld [vmem:[%s959] sm:$0xf]
        %v961 = vld [vmem:[%s959 + $0x4] sm:$0xf]
        %v962 = vld [vmem:[%s959 + $0x8] sm:$0xf]
        %v963 = vld [vmem:[%s959 + $0xc] sm:$0xf]
        %v964 = vld [vmem:[%s5 + $0x2] sm:$0x1]
        %v965 = vlaneseq
        %v966 = vshrl.u32 %v965, 7
        %v967 = vsub.s32 0, %v966
        %v968 = vrot.slane %v964, %v967
        %v973 = vunpack.c.l.b16 %v960
        %v974 = vunpack.c.l.b16 %v961
        %v975 = vunpack.c.l.b16 %v962
        %v976 = vunpack.c.l.b16 %v963
        %v977 = vpack.c.b16 %v974, %v973
        %v978 = vpack.c.b16 %v976, %v975
        %v982 = vsel %vm813, %v951, 0
        %v985 = vsel %vm813, %v952, 0
        %v988 = vsel %vm813, %v953, 0
        %v991 = vsel %vm813, %v954, 0
        %v994 = vsel %vm813, %v955, 0
        %v997 = vsel %vm813, %v956, 0
        %v1000 = vsel %vm813, %v957, 0
        %v1003 = vsel %vm813, %v958, 0
        %1005 = vmatprep.subr.bf16.mxu0 0
        %1006 = vmatpush1.bf16.msra.mxu0 %v977
        %1007 = vmatprep.subr.bf16.mxu0 0
        %1008 = vmatpush1.bf16.msra.mxu0 %v978
        %1009 = vmatprep.subr.bf16.mxu0 0
        %1010 = vmatpush1.bf16.msra.mxu0 0
        %1011 = vmatprep.subr.bf16.mxu0 0
        %1012 = vmatpush1.bf16.msra.mxu0 0
        %1013 = vmatprep.subr.bf16.mxu0 0
        %1014 = vmatpush1.bf16.msra.mxu0 0
        %1015 = vmatprep.subr.bf16.mxu0 0
        %1016 = vmatpush1.bf16.msra.mxu0 0
        %1017 = vmatprep.subr.bf16.mxu0 0
        %1018 = vmatpush1.bf16.msra.mxu0 0
        %1019 = vmatprep.subr.bf16.mxu0 0
        %1020 = vmatpush1.bf16.msra.mxu0 0
        %1021 = vmatprep.subr.bf16.mxu0 0
        %1022 = vmatpush1.bf16.msra.mxu0 0
        %1023 = vmatprep.subr.bf16.mxu0 0
        %1024 = vmatpush1.bf16.msra.mxu0 0
        %1025 = vmatprep.subr.bf16.mxu0 0
        %1026 = vmatpush1.bf16.msra.mxu0 0
        %1027 = vmatprep.subr.bf16.mxu0 0
        %1028 = vmatpush1.bf16.msra.mxu0 0
        %1029 = vmatprep.subr.bf16.mxu0 0
        %1030 = vmatpush1.bf16.msra.mxu0 0
        %1031 = vmatprep.subr.bf16.mxu0 0
        %1032 = vmatpush1.bf16.msra.mxu0 0
        %1033 = vmatprep.subr.bf16.mxu0 0
        %1034 = vmatpush1.bf16.msra.mxu0 0
        %1035 = vmatprep.subr.bf16.mxu0 0
        %1036 = vmatpush1.bf16.msra.mxu0 0
        %1037 = vmatprep.mubr.bf16.mxu0 0
        %1038 = vmatmul.mubr.bf16.gmra.mrb[0].mxu0 %v982
        %v1039 = vpop.f32.mrb[0].mxu0
        %v1040 = vadd.f32 %v968, %v1039
        %v1041 = vpop.f32.mrb[0].mxu0
        %v1042 = vpop.f32.mrb[0].mxu0
        %v1043 = vadd.f32 %v968, %v1042
        %v1044 = vpop.f32.mrb[0].mxu0
        %1045 = vmatprep.mubr.bf16.mxu0 0
        %1046 = vmatmul.mubr.bf16.gmra.mrb[0].mxu0 %v985
        %v1047 = vpop.f32.mrb[0].mxu0
        %v1048 = vadd.f32 %v968, %v1047
        %v1049 = vpop.f32.mrb[0].mxu0
        %v1050 = vpop.f32.mrb[0].mxu0
        %v1051 = vadd.f32 %v968, %v1050
        %v1052 = vpop.f32.mrb[0].mxu0
        %1053 = vmatprep.mubr.bf16.mxu0 0
        %1054 = vmatmul.mubr.bf16.gmra.mrb[0].mxu0 %v988
        %v1055 = vpop.f32.mrb[0].mxu0
        %v1056 = vadd.f32 %v968, %v1055
        %v1057 = vpop.f32.mrb[0].mxu0
        %v1058 = vpop.f32.mrb[0].mxu0
        %v1059 = vadd.f32 %v968, %v1058
        %v1060 = vpop.f32.mrb[0].mxu0
        %1061 = vmatprep.mubr.bf16.mxu0 0
        %1062 = vmatmul.mubr.bf16.gmra.mrb[0].mxu0 %v991
        %v1063 = vpop.f32.mrb[0].mxu0
        %v1064 = vadd.f32 %v968, %v1063
        %v1065 = vpop.f32.mrb[0].mxu0
        %v1066 = vpop.f32.mrb[0].mxu0
        %v1067 = vadd.f32 %v968, %v1066
        %v1068 = vpop.f32.mrb[0].mxu0
        %1069 = vmatprep.mubr.bf16.mxu0 0
        %1070 = vmatmul.mubr.bf16.gmra.mrb[0].mxu0 %v994
        %v1071 = vpop.f32.mrb[0].mxu0
        %v1072 = vadd.f32 %v968, %v1071
        %v1073 = vpop.f32.mrb[0].mxu0
        %v1074 = vpop.f32.mrb[0].mxu0
        %v1075 = vadd.f32 %v968, %v1074
        %v1076 = vpop.f32.mrb[0].mxu0
        %1077 = vmatprep.mubr.bf16.mxu0 0
        %1078 = vmatmul.mubr.bf16.gmra.mrb[0].mxu0 %v997
        %v1079 = vpop.f32.mrb[0].mxu0
        %v1080 = vadd.f32 %v968, %v1079
        %v1081 = vpop.f32.mrb[0].mxu0
        %v1082 = vpop.f32.mrb[0].mxu0
        %v1083 = vadd.f32 %v968, %v1082
        %v1084 = vpop.f32.mrb[0].mxu0
        %1085 = vmatprep.mubr.bf16.mxu0 0
        %1086 = vmatmul.mubr.bf16.gmra.mrb[0].mxu0 %v1000
        %v1087 = vpop.f32.mrb[0].mxu0
        %v1088 = vadd.f32 %v968, %v1087
        %v1089 = vpop.f32.mrb[0].mxu0
        %v1090 = vpop.f32.mrb[0].mxu0
        %v1091 = vadd.f32 %v968, %v1090
        %v1092 = vpop.f32.mrb[0].mxu0
        %1093 = vmatprep.mubr.bf16.mxu0 0
        %1094 = vmatmul.mubr.bf16.gmra.mrb[0].mxu0 %v1003
        %v1095 = vpop.f32.mrb[0].mxu0
        %v1096 = vadd.f32 %v968, %v1095
        %v1097 = vpop.f32.mrb[0].mxu0
        %v1098 = vpop.f32.mrb[0].mxu0
        %v1099 = vadd.f32 %v968, %v1098
        %v1100 = vpop.f32.mrb[0].mxu0
        %1101 = vdwg.mxu0
        %v1102 = vadd.f32 %v1040, %v768
        %v1103 = vadd.f32 %v1043, %v769
        %v1104 = vadd.f32 %v1048, %v770
        %v1105 = vadd.f32 %v1051, %v771
        %v1106 = vadd.f32 %v1056, %v772
        %v1107 = vadd.f32 %v1059, %v773
        %v1108 = vadd.f32 %v1064, %v774
        %v1109 = vadd.f32 %v1067, %v775
        %v1110 = vadd.f32 %v1072, %v776
        %v1111 = vadd.f32 %v1075, %v777
        %v1112 = vadd.f32 %v1080, %v778
        %v1113 = vadd.f32 %v1083, %v779
        %v1114 = vadd.f32 %v1088, %v780
        %v1115 = vadd.f32 %v1091, %v781
        %v1116 = vadd.f32 %v1096, %v782
        %v1117 = vadd.f32 %v1099, %v783
        %v1118 = vmax.f32 %v1102, 0.0
        %v1119 = vmax.f32 %v1103, 0.0
        %v1120 = vmax.f32 %v1104, 0.0
        %v1121 = vmax.f32 %v1105, 0.0
        %v1122 = vmax.f32 %v1106, 0.0
        %v1123 = vmax.f32 %v1107, 0.0
        %v1124 = vmax.f32 %v1108, 0.0
        %v1125 = vmax.f32 %v1109, 0.0
        %v1126 = vmax.f32 %v1110, 0.0
        %v1127 = vmax.f32 %v1111, 0.0
        %v1128 = vmax.f32 %v1112, 0.0
        %v1129 = vmax.f32 %v1113, 0.0
        %v1130 = vmax.f32 %v1114, 0.0
        %v1131 = vmax.f32 %v1115, 0.0
        %v1132 = vmax.f32 %v1116, 0.0
        %v1133 = vmax.f32 %v1117, 0.0
        %v1134 = vsel %vm813, %v1118, -inf
        %v1135 = vrot.slane %v1134, 4
        %v1136 = vmax.f32 %v1134, %v1135
        %v1137 = vrot.slane %v1136, 2
        %v1138 = vmax.f32 %v1136, %v1137
        %v1139 = vrot.slane %v1138, 1
        %v1140 = vmax.f32 %v1138, %v1139
        %v1141 = vsel %vm813, %v1119, -inf
        %v1142 = vrot.slane %v1141, 4
        %v1143 = vmax.f32 %v1141, %v1142
        %v1144 = vrot.slane %v1143, 2
        %v1145 = vmax.f32 %v1143, %v1144
        %v1146 = vrot.slane %v1145, 1
        %v1147 = vmax.f32 %v1145, %v1146
        %v1148 = vsel %vm813, %v1120, -inf
        %v1149 = vrot.slane %v1148, 4
        %v1150 = vmax.f32 %v1148, %v1149
        %v1151 = vrot.slane %v1150, 2
        %v1152 = vmax.f32 %v1150, %v1151
        %v1153 = vrot.slane %v1152, 1
        %v1154 = vmax.f32 %v1152, %v1153
        %v1155 = vsel %vm813, %v1121, -inf
        %v1156 = vrot.slane %v1155, 4
        %v1157 = vmax.f32 %v1155, %v1156
        %v1158 = vrot.slane %v1157, 2
        %v1159 = vmax.f32 %v1157, %v1158
        %v1160 = vrot.slane %v1159, 1
        %v1161 = vmax.f32 %v1159, %v1160
        %v1162 = vsel %vm813, %v1122, -inf
        %v1163 = vrot.slane %v1162, 4
        %v1164 = vmax.f32 %v1162, %v1163
        %v1165 = vrot.slane %v1164, 2
        %v1166 = vmax.f32 %v1164, %v1165
        %v1167 = vrot.slane %v1166, 1
        %v1168 = vmax.f32 %v1166, %v1167
        %v1169 = vsel %vm813, %v1123, -inf
        %v1170 = vrot.slane %v1169, 4
        %v1171 = vmax.f32 %v1169, %v1170
        %v1172 = vrot.slane %v1171, 2
        %v1173 = vmax.f32 %v1171, %v1172
        %v1174 = vrot.slane %v1173, 1
        %v1175 = vmax.f32 %v1173, %v1174
        %v1176 = vsel %vm813, %v1124, -inf
        %v1177 = vrot.slane %v1176, 4
        %v1178 = vmax.f32 %v1176, %v1177
        %v1179 = vrot.slane %v1178, 2
        %v1180 = vmax.f32 %v1178, %v1179
        %v1181 = vrot.slane %v1180, 1
        %v1182 = vmax.f32 %v1180, %v1181
        %v1183 = vsel %vm813, %v1125, -inf
        %v1184 = vrot.slane %v1183, 4
        %v1185 = vmax.f32 %v1183, %v1184
        %v1186 = vrot.slane %v1185, 2
        %v1187 = vmax.f32 %v1185, %v1186
        %v1188 = vrot.slane %v1187, 1
        %v1189 = vmax.f32 %v1187, %v1188
        %v1190 = vsel %vm813, %v1126, -inf
        %v1191 = vrot.slane %v1190, 4
        %v1192 = vmax.f32 %v1190, %v1191
        %v1193 = vrot.slane %v1192, 2
        %v1194 = vmax.f32 %v1192, %v1193
        %v1195 = vrot.slane %v1194, 1
        %v1196 = vmax.f32 %v1194, %v1195
        %v1197 = vsel %vm813, %v1127, -inf
        %v1198 = vrot.slane %v1197, 4
        %v1199 = vmax.f32 %v1197, %v1198
        %v1200 = vrot.slane %v1199, 2
        %v1201 = vmax.f32 %v1199, %v1200
        %v1202 = vrot.slane %v1201, 1
        %v1203 = vmax.f32 %v1201, %v1202
        %v1204 = vsel %vm813, %v1128, -inf
        %v1205 = vrot.slane %v1204, 4
        %v1206 = vmax.f32 %v1204, %v1205
        %v1207 = vrot.slane %v1206, 2
        %v1208 = vmax.f32 %v1206, %v1207
        %v1209 = vrot.slane %v1208, 1
        %v1210 = vmax.f32 %v1208, %v1209
        %v1211 = vsel %vm813, %v1129, -inf
        %v1212 = vrot.slane %v1211, 4
        %v1213 = vmax.f32 %v1211, %v1212
        %v1214 = vrot.slane %v1213, 2
        %v1215 = vmax.f32 %v1213, %v1214
        %v1216 = vrot.slane %v1215, 1
        %v1217 = vmax.f32 %v1215, %v1216
        %v1218 = vsel %vm813, %v1130, -inf
        %v1219 = vrot.slane %v1218, 4
        %v1220 = vmax.f32 %v1218, %v1219
        %v1221 = vrot.slane %v1220, 2
        %v1222 = vmax.f32 %v1220, %v1221
        %v1223 = vrot.slane %v1222, 1
        %v1224 = vmax.f32 %v1222, %v1223
        %v1225 = vsel %vm813, %v1131, -inf
        %v1226 = vrot.slane %v1225, 4
        %v1227 = vmax.f32 %v1225, %v1226
        %v1228 = vrot.slane %v1227, 2
        %v1229 = vmax.f32 %v1227, %v1228
        %v1230 = vrot.slane %v1229, 1
        %v1231 = vmax.f32 %v1229, %v1230
        %v1232 = vsel %vm813, %v1132, -inf
        %v1233 = vrot.slane %v1232, 4
        %v1234 = vmax.f32 %v1232, %v1233
        %v1235 = vrot.slane %v1234, 2
        %v1236 = vmax.f32 %v1234, %v1235
        %v1237 = vrot.slane %v1236, 1
        %v1238 = vmax.f32 %v1236, %v1237
        %v1239 = vsel %vm813, %v1133, -inf
        %v1240 = vrot.slane %v1239, 4
        %v1241 = vmax.f32 %v1239, %v1240
        %v1242 = vrot.slane %v1241, 2
        %v1243 = vmax.f32 %v1241, %v1242
        %v1244 = vrot.slane %v1243, 1
        %v1245 = vmax.f32 %v1243, %v1244
        %v1246 = vpack.c.bf16 %v1140, %v1140
        %v1247 = vpack.c.bf16 %v1147, %v1147
        %v1248 = vpack.c.bf16 %v1154, %v1154
        %v1249 = vpack.c.bf16 %v1161, %v1161
        %v1250 = vpack.c.bf16 %v1168, %v1168
        %v1251 = vpack.c.bf16 %v1175, %v1175
        %v1252 = vpack.c.bf16 %v1182, %v1182
        %v1253 = vpack.c.bf16 %v1189, %v1189
        %v1254 = vpack.c.bf16 %v1196, %v1196
        %v1255 = vpack.c.bf16 %v1203, %v1203
        %v1256 = vpack.c.bf16 %v1210, %v1210
        %v1257 = vpack.c.bf16 %v1217, %v1217
        %v1258 = vpack.c.bf16 %v1224, %v1224
        %v1259 = vpack.c.bf16 %v1231, %v1231
        %v1260 = vpack.c.bf16 %v1238, %v1238
        %v1261 = vpack.c.bf16 %v1245, %v1245
        %s1262 = scalar_lea.vmem %s4, 32
        %v1263 = vld [vmem:[%s1262] sm:$0xf]
        %v1264 = vld [vmem:[%s1262 + $0x4] sm:$0xf]
        %v1265 = vld [vmem:[%s1262 + $0x8] sm:$0xf]
        %v1266 = vld [vmem:[%s1262 + $0xc] sm:$0xf]
        %v1267 = vld [vmem:[%s5 + $0x3] sm:$0x1]
        %v1268 = vlaneseq
        %v1269 = vshrl.u32 %v1268, 7
        %v1270 = vsub.s32 0, %v1269
        %v1271 = vrot.slane %v1267, %v1270
        %v1288 = vunpack.c.l.b16 %v1246
        %v1289 = vunpack.c.l.b16 %v1247
        %v1290 = vunpack.c.l.b16 %v1248
        %v1291 = vunpack.c.l.b16 %v1249
        %v1292 = vunpack.c.l.b16 %v1250
        %v1293 = vunpack.c.l.b16 %v1251
        %v1294 = vunpack.c.l.b16 %v1252
        %v1295 = vunpack.c.l.b16 %v1253
        %v1296 = vunpack.c.l.b16 %v1254
        %v1297 = vunpack.c.l.b16 %v1255
        %v1298 = vunpack.c.l.b16 %v1256
        %v1299 = vunpack.c.l.b16 %v1257
        %v1300 = vunpack.c.l.b16 %v1258
        %v1301 = vunpack.c.l.b16 %v1259
        %v1302 = vunpack.c.l.b16 %v1260
        %v1303 = vunpack.c.l.b16 %v1261
        %vm1304 = vcmask 1041409
        %v1305 = vsel %vm1304, %v1289, %v1288
        %vm1306 = vcmask 1042434
        %v1307 = vsel %vm1306, %v1290, %v1305
        %vm1308 = vcmask 1043459
        %v1309 = vsel %vm1308, %v1291, %v1307
        %vm1310 = vcmask 1044484
        %v1311 = vsel %vm1310, %v1292, %v1309
        %vm1312 = vcmask 1045509
        %v1313 = vsel %vm1312, %v1293, %v1311
        %vm1314 = vcmask 1046534
        %v1315 = vsel %vm1314, %v1294, %v1313
        %vm1316 = vcmask 1047559
        %v1317 = vsel %vm1316, %v1295, %v1315
        %v1318 = vsel %vm1304, %v1297, %v1296
        %v1319 = vsel %vm1306, %v1298, %v1318
        %v1320 = vsel %vm1308, %v1299, %v1319
        %v1321 = vsel %vm1310, %v1300, %v1320
        %v1322 = vsel %vm1312, %v1301, %v1321
        %v1323 = vsel %vm1314, %v1302, %v1322
        %v1324 = vsel %vm1316, %v1303, %v1323
        %v1325 = vpack.c.b16 %v1324, %v1317
        %v1330 = vunpack.c.l.b16 %v1263
        %v1331 = vunpack.c.l.b16 %v1264
        %v1332 = vunpack.c.l.b16 %v1265
        %v1333 = vunpack.c.l.b16 %v1266
        %v1334 = vpack.c.b16 %v1331, %v1330
        %v1335 = vpack.c.b16 %v1333, %v1332
        %v1339 = vsel %vm813, %v1325, 0
        %1341 = vmatprep.subr.bf16.mxu0 0
        %1342 = vmatpush1.bf16.msra.mxu0 %v1334
        %1343 = vmatprep.subr.bf16.mxu0 0
        %1344 = vmatpush1.bf16.msra.mxu0 %v1335
        %1345 = vmatprep.subr.bf16.mxu0 0
        %1346 = vmatpush1.bf16.msra.mxu0 0
        %1347 = vmatprep.subr.bf16.mxu0 0
        %1348 = vmatpush1.bf16.msra.mxu0 0
        %1349 = vmatprep.subr.bf16.mxu0 0
        %1350 = vmatpush1.bf16.msra.mxu0 0
        %1351 = vmatprep.subr.bf16.mxu0 0
        %1352 = vmatpush1.bf16.msra.mxu0 0
        %1353 = vmatprep.subr.bf16.mxu0 0
        %1354 = vmatpush1.bf16.msra.mxu0 0
        %1355 = vmatprep.subr.bf16.mxu0 0
        %1356 = vmatpush1.bf16.msra.mxu0 0
        %1357 = vmatprep.subr.bf16.mxu0 0
        %1358 = vmatpush1.bf16.msra.mxu0 0
        %1359 = vmatprep.subr.bf16.mxu0 0
        %1360 = vmatpush1.bf16.msra.mxu0 0
        %1361 = vmatprep.subr.bf16.mxu0 0
        %1362 = vmatpush1.bf16.msra.mxu0 0
        %1363 = vmatprep.subr.bf16.mxu0 0
        %1364 = vmatpush1.bf16.msra.mxu0 0
        %1365 = vmatprep.subr.bf16.mxu0 0
        %1366 = vmatpush1.bf16.msra.mxu0 0
        %1367 = vmatprep.subr.bf16.mxu0 0
        %1368 = vmatpush1.bf16.msra.mxu0 0
        %1369 = vmatprep.subr.bf16.mxu0 0
        %1370 = vmatpush1.bf16.msra.mxu0 0
        %1371 = vmatprep.subr.bf16.mxu0 0
        %1372 = vmatpush1.bf16.msra.mxu0 0
        %1373 = vmatprep.mubr.bf16.mxu0 0
        %1374 = vmatmul.mubr.bf16.gmra.mrb[0].mxu0 %v1339
        %v1375 = vpop.f32.mrb[0].mxu0
        %v1376 = vadd.f32 %v1271, %v1375
        %v1377 = vpop.f32.mrb[0].mxu0
        %v1378 = vpop.f32.mrb[0].mxu0
        %v1379 = vadd.f32 %v1271, %v1378
        %v1380 = vpop.f32.mrb[0].mxu0
        %1381 = vdwg.mxu0
        %v1382 = vmax.f32 %v1376, 0.0
        %v1383 = vmax.f32 %v1379, 0.0
        %v1384 = vpack.c.bf16 %v1383, %v1382
        %s1385 = scalar_lea.vmem %s4, 48
        %v1386 = vld [vmem:[%s1385] sm:$0xf]
        %v1387 = vld [vmem:[%s1385 + $0x4] sm:$0xf]
        %v1388 = vld [vmem:[%s1385 + $0x8] sm:$0xf]
        %v1389 = vld [vmem:[%s1385 + $0xc] sm:$0xf]
        %v1390 = vld [vmem:[%s5 + $0x4] sm:$0x1]
        %v1391 = vlaneseq
        %v1392 = vshrl.u32 %v1391, 7
        %v1393 = vsub.s32 0, %v1392
        %v1394 = vrot.slane %v1390, %v1393
        %v1399 = vunpack.c.l.b16 %v1386
        %v1400 = vunpack.c.l.b16 %v1387
        %v1401 = vunpack.c.l.b16 %v1388
        %v1402 = vunpack.c.l.b16 %v1389
        %v1403 = vpack.c.b16 %v1400, %v1399
        %v1404 = vpack.c.b16 %v1402, %v1401
        %v1408 = vsel %vm813, %v1384, 0
        %1410 = vmatprep.subr.bf16.mxu0 0
        %1411 = vmatpush1.bf16.msra.mxu0 %v1403
        %1412 = vmatprep.subr.bf16.mxu0 0
        %1413 = vmatpush1.bf16.msra.mxu0 %v1404
        %1414 = vmatprep.subr.bf16.mxu0 0
        %1415 = vmatpush1.bf16.msra.mxu0 0
        %1416 = vmatprep.subr.bf16.mxu0 0
        %1417 = vmatpush1.bf16.msra.mxu0 0
        %1418 = vmatprep.subr.bf16.mxu0 0
        %1419 = vmatpush1.bf16.msra.mxu0 0
        %1420 = vmatprep.subr.bf16.mxu0 0
        %1421 = vmatpush1.bf16.msra.mxu0 0
        %1422 = vmatprep.subr.bf16.mxu0 0
        %1423 = vmatpush1.bf16.msra.mxu0 0
        %1424 = vmatprep.subr.bf16.mxu0 0
        %1425 = vmatpush1.bf16.msra.mxu0 0
        %1426 = vmatprep.subr.bf16.mxu0 0
        %1427 = vmatpush1.bf16.msra.mxu0 0
        %1428 = vmatprep.subr.bf16.mxu0 0
        %1429 = vmatpush1.bf16.msra.mxu0 0
        %1430 = vmatprep.subr.bf16.mxu0 0
        %1431 = vmatpush1.bf16.msra.mxu0 0
        %1432 = vmatprep.subr.bf16.mxu0 0
        %1433 = vmatpush1.bf16.msra.mxu0 0
        %1434 = vmatprep.subr.bf16.mxu0 0
        %1435 = vmatpush1.bf16.msra.mxu0 0
        %1436 = vmatprep.subr.bf16.mxu0 0
        %1437 = vmatpush1.bf16.msra.mxu0 0
        %1438 = vmatprep.subr.bf16.mxu0 0
        %1439 = vmatpush1.bf16.msra.mxu0 0
        %1440 = vmatprep.subr.bf16.mxu0 0
        %1441 = vmatpush1.bf16.msra.mxu0 0
        %1442 = vmatprep.mubr.bf16.mxu0 0
        %1443 = vmatmul.mubr.bf16.gmra.mrb[0].mxu0 %v1408
        %v1444 = vpop.f32.mrb[0].mxu0
        %v1445 = vadd.f32 %v1394, %v1444
        %v1446 = vpop.f32.mrb[0].mxu0
        %v1447 = vpop.f32.mrb[0].mxu0
        %v1448 = vadd.f32 %v1394, %v1447
        %v1449 = vpop.f32.mrb[0].mxu0
        %1450 = vdwg.mxu0
        %v1467 = vsel %vm1304, %v1147, %v1140
        %v1468 = vsel %vm1306, %v1154, %v1467
        %v1469 = vsel %vm1308, %v1161, %v1468
        %v1470 = vsel %vm1310, %v1168, %v1469
        %v1471 = vsel %vm1312, %v1175, %v1470
        %v1472 = vsel %vm1314, %v1182, %v1471
        %v1473 = vsel %vm1316, %v1189, %v1472
        %v1474 = vsel %vm1304, %v1203, %v1196
        %v1475 = vsel %vm1306, %v1210, %v1474
        %v1476 = vsel %vm1308, %v1217, %v1475
        %v1477 = vsel %vm1310, %v1224, %v1476
        %v1478 = vsel %vm1312, %v1231, %v1477
        %v1479 = vsel %vm1314, %v1238, %v1478
        %v1480 = vsel %vm1316, %v1245, %v1479
        %v1483 = vadd.f32 %v1445, %v1473
        %v1484 = vadd.f32 %v1448, %v1480
        %v1485 = vmax.f32 %v1483, 0.0
        %v1486 = vmax.f32 %v1484, 0.0
        %1487 = vst.msk [vmem:[%s295] sm:$0xff] %vm813, %v1485
        %1488 = vst.msk [vmem:[%s295 + $0x8] sm:$0xff] %vm813, %v1486
        %s1489 = sand.u32 %s182, 1
        %s1490 = scalar_lea.sflag [#allocation3], %s1489
        %s1491 = sand.u32 %s182, 1
        %s1492 = smul.addr %s1491, 16
        %s1493 = scalar_lea.vmem [#allocation2], %s1492
        // Predicated region
        $region45: #{encoder_forward.1} parent=43 // pred_check
          %p1494 = pneg %p192
        $region46: #{encoder_forward.1} parent=43 // pred_check_branch
          %1496 = sbr.rel (%p1494) target = $region48
        $region47: #{encoder_forward.1} parent=43 // pred_region
          %s1497 = smul.u32 2, %s25
          %s1499 = ssub.s32 256, 256
          %1500 = vsyncadd %s1490, %s1499
          %s1501 = smul.addr %s24, 2
          %s1502 = sadd.s32 %s1497, %s1501
          %s1503 = smul.addr %s1502, 128
          %s1504 = scalar_lea.hbm %s6, %s1503
          %s1505 = sshll.u32 %s1493, 4
          %s1506 = int_to_ptr.vmem [resolvable:$true] %s1505
          %1511 = dma.vmem_to_hbm [thread:$0]  %s1506, 256, %s1504, %s1490, 128, 128, 8
        $region48: #{encoder_forward.1} parent=43 // pred_fallthru
          _
      $region44: #{encoder_forward.1} parent=5 // pred_fallthru
        _
      %p1512 = scmp.le.s32.totalorder 2, %s15
      // Predicated region
      $region49: #{encoder_forward.1} parent=5 // pred_check
        %p1513 = pneg %p1512
      $region50: #{encoder_forward.1} parent=5 // pred_check_branch
        %1515 = sbr.rel (%p1513) target = $region52
      $region51: #{encoder_forward.1} parent=5 // pred_region
        %s1516 = ssub.s32 %s15, 2
        // Predicated region
        $region53: #{encoder_forward.1} parent=51 // pred_check
          %p1517 = pneg %p198
        $region54: #{encoder_forward.1} parent=51 // pred_check_branch
          %1519 = sbr.rel (%p1517) target = $region56
        $region55: #{encoder_forward.1} parent=51 // pred_region
          %s1520 = sand.u32 %s183, 1
          %s1521 = scalar_lea.sflag [#allocation3], %s1520
          %s1522 = sand.u32 %s183, 1
          %s1523 = smul.addr %s1522, 16
          %s1524 = scalar_lea.vmem [#allocation2], %s1523
          %1525 = dma.done %s1521, 256
        $region56: #{encoder_forward.1} parent=51 // pred_fallthru
          _
      $region52: #{encoder_forward.1} parent=5 // pred_fallthru
        _
    $region6: #{encoder_forward.1} parent=1 // loop_footer
      %s19 = sadd.s32 1, %s15
    $region7: #{encoder_forward.1} parent=1 // loop_footer_branch
      %14 = sbr.rel target = $region3
    $region8: #{encoder_forward.1} parent=1 // loop_exit
      _
    %1526 = vsyncpa [#allocation3], 1
    %s1527 = scalar_lea.sflag [#allocation3], 1
    %1528 = vsyncpa %s1527, 1

</llo_original>
